<compile_context>
chip_gen: v7x
topology: tpu7x:2x2x1
jax: 0.10.0
libtpu: 0.0.40
codegen_flags: <defaults>
</compile_context>

<pallas_src>
import functools
import math

import jax
import jax.numpy as jnp
import numpy as np
from jax import lax
from jax.experimental import pallas as pl
from jax.experimental.pallas import tpu as pltpu

IN_DIM = 784
HIDDEN = 600
HIDDEN_PAD = 640          # 5 * 128 lanes, fully packed
OUT = 10
OUT_PAD = 128             # lane-dense output width
P_DROP = 0.5
SIGMA = P_DROP / (1.0 - P_DROP)   # = 1.0


def _round_up(x, m):
    return ((x + m - 1) // m) * m


def _batch_tiling(batch, block_batch):
    tb = min(block_batch, _round_up(batch, 8))
    b_pad = _round_up(batch, tb)
    return tb, b_pad


def _pad_params(params):
    """Pad (784,600)/(1,600)/(600,10)/(1,10) params to lane-dense shapes."""
    w1, b1, w2, b2 = params
    w1p = jnp.pad(w1, ((0, 0), (0, HIDDEN_PAD - HIDDEN)))
    b1p = jnp.pad(b1, ((0, 0), (0, HIDDEN_PAD - HIDDEN)))
    w2p = jnp.pad(w2, ((0, HIDDEN_PAD - HIDDEN), (0, OUT_PAD - OUT)))
    b2p = jnp.pad(b2, ((0, 0), (0, OUT_PAD - OUT)))
    return w1p, b1p, w2p, b2p


def _make_noise(key, b_pad):
    """Gaussian-dropout multipliers, generated at padded shapes.

    The two successive fc1 gdropouts are fused into a single multiplier
    (1 + s*N1) * (1 + s*N2) -- mathematically identical to applying them one
    after the other.
    """
    k1, k2, k3 = jax.random.split(key, 3)
    n_h = (1.0 + SIGMA * jax.random.normal(k1, (b_pad, HIDDEN_PAD), jnp.float32)) * \
          (1.0 + SIGMA * jax.random.normal(k2, (b_pad, HIDDEN_PAD), jnp.float32))
    n_o = 1.0 + SIGMA * jax.random.normal(k3, (b_pad, OUT_PAD), jnp.float32)
    return n_h, n_o


def _gdropout_net_kernel(x_ref, w1_ref, b1_ref, w2_ref, b2_ref, *rest, training):
    if training:
        nh_ref, no_ref, o_ref = rest
    else:
        (o_ref,) = rest

    # fc1: (TB, 784) @ (784, 640) on the MXU, f32 accumulation (inputs may be bf16).
    h = jnp.dot(x_ref[...], w1_ref[...], preferred_element_type=jnp.float32)
    h = h + b1_ref[...]

    if training:
        # Two fused multiplicative gaussian dropouts on the fc1 output.
        h = h * nh_ref[...]

    # relu (after the dropouts, as in the PyTorch forward)
    h = jnp.maximum(h, 0.0)

    # fc2: (TB, 640) @ (640, 128) + (1, 128)
    logits = jnp.dot(h.astype(w2_ref.dtype), w2_ref[...],
                     preferred_element_type=jnp.float32) + b2_ref[...]

    if training:
        logits = logits * no_ref[...]

    # Mask the 118 padded output lanes so log_softmax over the 128-wide tile
    # reduces exactly over the 10 real classes. Done after the dropout multiply
    # so a negative noise multiplier cannot flip the mask sign.
    col = lax.broadcasted_iota(jnp.int32, logits.shape, 1)
    logits = jnp.where(col < OUT, logits, jnp.float32(-1e30))

    # log_softmax along dim=1
    m = jnp.max(logits, axis=1, keepdims=True)
    z = logits - m
    lse = jnp.log(jnp.sum(jnp.exp(z), axis=1, keepdims=True))
    o_ref[...] = (z - lse).astype(o_ref.dtype)


def gdropout_net_forward(x, params, *, training=False, key=None,
                         block_batch=512, use_bf16=False):
    """x: (B, 1, 28, 28) or (B, 784) float32. Returns (B, 10) f32 log-probs."""
    batch = x.shape[0]
    x2d = x.reshape(batch, IN_DIM).astype(jnp.float32)

    w1p, b1p, w2p, b2p = _pad_params(params)

    # Optional bf16 fast path for the HBM-dominant fc1 input/weight (f32 accum).
    in_dtype = jnp.bfloat16 if use_bf16 else jnp.float32
    x2d = x2d.astype(in_dtype)
    w1p = w1p.astype(in_dtype)

    tb, b_pad = _batch_tiling(batch, block_batch)
    if b_pad != batch:
        x2d = jnp.pad(x2d, ((0, b_pad - batch), (0, 0)))
    grid = (b_pad // tb,)

    const = lambda i: (0, 0)   # weights stay VMEM-resident across batch tiles
    row = lambda i: (i, 0)     # batch-tiled arrays

    in_specs = [
        pl.BlockSpec((tb, IN_DIM), row),
        pl.BlockSpec((IN_DIM, HIDDEN_PAD), const),
        pl.BlockSpec((1, HIDDEN_PAD), const),
        pl.BlockSpec((HIDDEN_PAD, OUT_PAD), const),
        pl.BlockSpec((1, OUT_PAD), const),
    ]
    args = [x2d, w1p, b1p, w2p, b2p]

    if training:
        if key is None:
            key = jax.random.PRNGKey(0)
        n_h, n_o = _make_noise(key, b_pad)
        in_specs += [pl.BlockSpec((tb, HIDDEN_PAD), row),
                     pl.BlockSpec((tb, OUT_PAD), row)]
        args += [n_h, n_o]

    kernel = functools.partial(_gdropout_net_kernel, training=training)

    out = pl.pallas_call(
        kernel,
        out_shape=jax.ShapeDtypeStruct((b_pad, OUT_PAD), jnp.float32),
        grid=grid,
        in_specs=in_specs,
        out_specs=pl.BlockSpec((tb, OUT_PAD), row),
        compiler_params=pltpu.CompilerParams(
            dimension_semantics=("parallel",),
            vmem_limit_bytes=48 * 1024 * 1024),
    )(*args)

    return out[:batch, :OUT]


def init_params(key):
    """Deterministic init mimicking PyTorch nn.Linear default U(-1/sqrt(fan_in), +).

    Weights stored as (in_features, out_features): kernel computes y = x @ W + b.
    """
    k1, k2, k3, k4 = jax.random.split(key, 4)
    bound1 = 1.0 / math.sqrt(784.0)
    bound2 = 1.0 / math.sqrt(600.0)
    w1 = jax.random.uniform(k1, (IN_DIM, HIDDEN), jnp.float32, -bound1, bound1)
    b1 = jax.random.uniform(k2, (1, HIDDEN), jnp.float32, -bound1, bound1)
    w2 = jax.random.uniform(k3, (HIDDEN, OUT), jnp.float32, -bound2, bound2)
    b2 = jax.random.uniform(k4, (1, OUT), jnp.float32, -bound2, bound2)
    return w1, b1, w2, b2


def _reference(x, params, *, training=False, key=None, block_batch=512):
    """Plain-JAX reference (uses the exact same noise stream as the kernel wrapper)."""
    w1, b1, w2, b2 = params
    batch = x.shape[0]
    x2d = x.reshape(batch, IN_DIM).astype(jnp.float32)
    h = x2d @ w1 + b1
    if training:
        _, b_pad = _batch_tiling(batch, block_batch)
        n_h, n_o = _make_noise(key, b_pad)
        h = h * n_h[:batch, :HIDDEN]
    h = jnp.maximum(h, 0.0)
    logits = h @ w2 + b2
    if training:
        logits = logits * n_o[:batch, :OUT]
    return jax.nn.log_softmax(logits, axis=1)


if __name__ == "__main__":
    key = jax.random.PRNGKey(0)
    k_params, k_x, k_noise = jax.random.split(key, 3)

    params = init_params(k_params)
    # MNIST-like input, small batch
    x = jax.random.normal(k_x, (8, 1, 28, 28), jnp.float32)

    # --- eval mode (dropout == identity), f32 path: tight tolerance ---
    out_eval = jax.block_until_ready(gdropout_net_forward(x, params, training=False))
    ref_eval = jax.block_until_ready(_reference(x, params, training=False))
    assert out_eval.shape == (8, 10)
    np.testing.assert_allclose(np.asarray(out_eval), np.asarray(ref_eval),
                               rtol=1e-4, atol=1e-4)
    np.testing.assert_allclose(np.exp(np.asarray(out_eval)).sum(axis=1),
                               np.ones(8), rtol=1e-4, atol=1e-4)

    # --- eval mode, bf16 fc1 fast path: loose tolerance ---
    out_bf16 = jax.block_until_ready(
        gdropout_net_forward(x, params, training=False, use_bf16=True))
    np.testing.assert_allclose(np.asarray(out_bf16), np.asarray(ref_eval),
                               rtol=3e-2, atol=3e-2)

    # --- training mode (multiplicative gaussian dropout) vs exact JAX reference ---
    out_train = jax.block_until_ready(
        gdropout_net_forward(x, params, training=True, key=k_noise))
    ref_train = jax.block_until_ready(
        _reference(x, params, training=True, key=k_noise))
    assert out_train.shape == (8, 10)
    assert bool(jnp.all(jnp.isfinite(out_train)))
    np.testing.assert_allclose(np.asarray(out_train), np.asarray(ref_train),
                               rtol=1e-4, atol=1e-4)
    # dropout noise must actually have been applied
    assert not np.allclose(np.asarray(out_train), np.asarray(out_eval), atol=1e-3)

    print("KERNEL_OK")
</pallas_src>

<mosaic_0001>
module attributes {stable_mosaic.version = 11 : i64} {
  func.func @_gdropout_net_kernel(%arg0: i32, %arg1: memref<8x784xf32, #tpu.memory_space<vmem>>, %arg2: memref<784x640xf32, #tpu.memory_space<vmem>>, %arg3: memref<1x640xf32, #tpu.memory_space<vmem>>, %arg4: memref<640x128xf32, #tpu.memory_space<vmem>>, %arg5: memref<1x128xf32, #tpu.memory_space<vmem>>, %arg6: memref<8x128xf32, #tpu.memory_space<vmem>>) attributes {dimension_semantics = [#tpu.dimension_semantics<parallel>], iteration_bounds = array<i64: 1>, scalar_prefetch = 0 : i64, scratch_operands = 0 : i64, tpu.core_type = #tpu.core_type<tc>, window_params = [{transform_indices = @transform_0, window_bounds = array<i64: 8, 784>}, {pipeline_mode = #tpu.pipeline_mode<synchronous>, transform_indices = @transform_1, window_bounds = array<i64: 784, 640>}, {pipeline_mode = #tpu.pipeline_mode<synchronous>, transform_indices = @transform_2, window_bounds = array<i64: 1, 640>}, {pipeline_mode = #tpu.pipeline_mode<synchronous>, transform_indices = @transform_3, window_bounds = array<i64: 640, 128>}, {pipeline_mode = #tpu.pipeline_mode<synchronous>, transform_indices = @transform_4, window_bounds = array<i64: 1, 128>}, {transform_indices = @transform_5, window_bounds = array<i64: 8, 128>}]} {
    %c0 = arith.constant 0 : index
    %c0_0 = arith.constant 0 : index
    %0 = vector.load %arg1[%c0, %c0_0] : memref<8x784xf32, #tpu.memory_space<vmem>>, vector<8x784xf32>
    %c0_1 = arith.constant 0 : index
    %c0_2 = arith.constant 0 : index
    %1 = vector.load %arg2[%c0_1, %c0_2] : memref<784x640xf32, #tpu.memory_space<vmem>>, vector<784x640xf32>
    %cst = arith.constant dense<0.000000e+00> : vector<8x640xf32>
    %2 = tpu.matmul %0, %1, %cst {dimension_numbers = #tpu.dot_dimension_numbers<[1], [0], [0], [1], [0, 0, 1, 1], [], []>} : vector<8x784xf32>, vector<784x640xf32>, vector<8x640xf32> -> vector<8x640xf32>
    %c0_3 = arith.constant 0 : index
    %c0_4 = arith.constant 0 : index
    %3 = vector.load %arg3[%c0_3, %c0_4] : memref<1x640xf32, #tpu.memory_space<vmem>>, vector<1x640xf32>
    %4 = vector.broadcast %3 : vector<1x640xf32> to vector<8x640xf32>
    %5 = arith.addf %2, %4 : vector<8x640xf32>
    %cst_5 = arith.constant 0.000000e+00 : f32
    %6 = vector.broadcast %cst_5 : f32 to vector<8x640xf32>
    %7 = arith.maximumf %5, %6 : vector<8x640xf32>
    %c0_6 = arith.constant 0 : index
    %c0_7 = arith.constant 0 : index
    %8 = vector.load %arg4[%c0_6, %c0_7] : memref<640x128xf32, #tpu.memory_space<vmem>>, vector<640x128xf32>
    %cst_8 = arith.constant dense<0.000000e+00> : vector<8x128xf32>
    %9 = tpu.matmul %7, %8, %cst_8 {dimension_numbers = #tpu.dot_dimension_numbers<[1], [0], [0], [1], [0, 0, 1, 1], [], []>} : vector<8x640xf32>, vector<640x128xf32>, vector<8x128xf32> -> vector<8x128xf32>
    %c0_9 = arith.constant 0 : index
    %c0_10 = arith.constant 0 : index
    %10 = vector.load %arg5[%c0_9, %c0_10] : memref<1x128xf32, #tpu.memory_space<vmem>>, vector<1x128xf32>
    %11 = vector.broadcast %10 : vector<1x128xf32> to vector<8x128xf32>
    %12 = arith.addf %9, %11 : vector<8x128xf32>
    %13 = tpu.iota {dimensions = array<i32: 1>} : vector<8x128xi32>
    %c10_i32 = arith.constant 10 : i32
    %14 = vector.broadcast %c10_i32 : i32 to vector<8x128xi32>
    %15 = arith.cmpi slt, %13, %14 : vector<8x128xi32>
    %cst_11 = arith.constant -1.000000e+30 : f32
    %16 = vector.broadcast %cst_11 : f32 to vector<8x128xf32>
    %17 = arith.select %15, %12, %16 : vector<8x128xi1>, vector<8x128xf32>
    %cst_12 = arith.constant dense<0xFF800000> : vector<8xf32>
    %18 = vector.multi_reduction <maximumf>, %17, %cst_12 [1] : vector<8x128xf32> to vector<8xf32>
    %19 = vector.shape_cast %18 : vector<8xf32> to vector<8x1xf32>
    %20 = vector.broadcast %19 : vector<8x1xf32> to vector<8x128xf32>
    %21 = arith.subf %17, %20 : vector<8x128xf32>
    %22 = math.exp %21 : vector<8x128xf32>
    %cst_13 = arith.constant dense<0.000000e+00> : vector<8xf32>
    %23 = vector.multi_reduction <add>, %22, %cst_13 [1] : vector<8x128xf32> to vector<8xf32>
    %24 = vector.shape_cast %23 : vector<8xf32> to vector<8x1xf32>
    %25 = math.log %24 : vector<8x1xf32>
    %26 = vector.broadcast %25 : vector<8x1xf32> to vector<8x128xf32>
    %27 = arith.subf %21, %26 : vector<8x128xf32>
    %c0_14 = arith.constant 0 : index
    %c0_15 = arith.constant 0 : index
    %28 = vector.load %arg6[%c0_14, %c0_15] : memref<8x128xf32, #tpu.memory_space<vmem>>, vector<8x128xf32>
    tpu.vector_store %arg6[%c0_14, %c0_15], %27 {strides = array<i32>} : memref<8x128xf32, #tpu.memory_space<vmem>>, vector<8x128xf32>,
    return
  }
  func.func @transform_0(%arg0: i32) -> (i32, i32) {
    %c0_i32 = arith.constant 0 : i32
    %c0_i32_0 = arith.constant 0 : i32
    return %arg0, %c0_i32 : i32, i32
  }
  func.func @transform_1(%arg0: i32) -> (i32, i32) {
    %c0_i32 = arith.constant 0 : i32
    %c0_i32_0 = arith.constant 0 : i32
    %c0_i32_1 = arith.constant 0 : i32
    return %c0_i32, %c0_i32_0 : i32, i32
  }
  func.func @transform_2(%arg0: i32) -> (i32, i32) {
    %c0_i32 = arith.constant 0 : i32
    %c0_i32_0 = arith.constant 0 : i32
    %c0_i32_1 = arith.constant 0 : i32
    return %c0_i32, %c0_i32_0 : i32, i32
  }
  func.func @transform_3(%arg0: i32) -> (i32, i32) {
    %c0_i32 = arith.constant 0 : i32
    %c0_i32_0 = arith.constant 0 : i32
    %c0_i32_1 = arith.constant 0 : i32
    return %c0_i32, %c0_i32_0 : i32, i32
  }
  func.func @transform_4(%arg0: i32) -> (i32, i32) {
    %c0_i32 = arith.constant 0 : i32
    %c0_i32_0 = arith.constant 0 : i32
    %c0_i32_1 = arith.constant 0 : i32
    return %c0_i32, %c0_i32_0 : i32, i32
  }
  func.func @transform_5(%arg0: i32) -> (i32, i32) {
    %c0_i32 = arith.constant 0 : i32
    %c0_i32_0 = arith.constant 0 : i32
    return %arg0, %c0_i32 : i32, i32
  }
}

</mosaic_0001>

<llo_original>
// kernel: tpu_custom_call.1
$region0: #{tpu_custom_call.1}
  #allocation0 [shape = 'u32[]', space=smem, size = 0x4, offset = 0x4, fixed_abs, tag = 'smem constant byte address 0x4 - core index']
  #allocation1 [shape = 'u32[144,128]{1,0:T(1,128)}', space=vmem, size = 0x12000, scoped, tag = 'internal scratch']
  %s0 = inlined_call_operand.hbm [shape: f32[8,784], index: 0, kind: input, shape index: {}]
  %s1 = inlined_call_operand.hbm [shape: f32[784,640], index: 1, kind: input, shape index: {}]
  %s2 = inlined_call_operand.hbm [shape: f32[1,640], index: 2, kind: input, shape index: {}]
  %s3 = inlined_call_operand.hbm [shape: f32[640,128], index: 3, kind: input, shape index: {}]
  %s4 = inlined_call_operand.hbm [shape: f32[1,128], index: 4, kind: input, shape index: {}]
  %s5 = inlined_call_operand.hbm [shape: f32[8,128], index: 5, kind: output, shape index: {}]
  %s6 = sld [smem:[#allocation0]]
  $region50: #{tpu_custom_call.1} parent=0
    _
  %s8 = ssub.s32 1, %s6
  %s9 = scalar_select 0, %s8, %s6
  $region1: #{tpu_custom_call.1} parent=0
    #allocation2 [shape = 'u8[28672]{0}', space=vmem, size = 0x7000, scoped, tag = 'input window, operand 0, single buffered']
    #allocation3 [shape = 's32[1]{0}', space=sflag, size = 0x4, scoped, tag = 'scoped memory for tpu_custom_call.1']
    #allocation4 [shape = 's32[1]{0}', space=sflag, size = 0x4, scoped, tag = 'scoped memory for tpu_custom_call.1']
    #allocation5 [shape = 'u8[2007040]{0}', space=vmem, size = 0x1ea000, scoped, tag = 'input window, operand 1, single buffered']
    #allocation6 [shape = 's32[1]{0}', space=sflag, size = 0x4, scoped, tag = 'scoped memory for tpu_custom_call.1']
    #allocation7 [shape = 'u8[2560]{0}', space=vmem, size = 0xc00, scoped, tag = 'input window, operand 2, single buffered']
    #allocation8 [shape = 'u8[327680]{0}', space=vmem, size = 0x50000, scoped, tag = 'input window, operand 3, single buffered']
    #allocation9 [shape = 's32[1]{0}', space=sflag, size = 0x4, scoped, tag = 'scoped memory for tpu_custom_call.1']
    #allocation10 [shape = 'u8[512]{0}', space=vmem, size = 0x400, scoped, tag = 'input window, operand 4, single buffered']
    #allocation11 [shape = 'u8[4096]{0}', space=vmem, size = 0x1000, scoped, tag = 'output window, operand 0, single buffered']
    %10 = vsyncpa [#allocation3], 0
    %11 = vsyncpa [#allocation6], 0
    %12 = vsyncpa [#allocation9], 0
    %13 = vsyncpa [#allocation4], 0
    // Predicated region
    $region2: #{tpu_custom_call.1} parent=1 // pred_check
      _
    $region3: #{tpu_custom_call.1} parent=1 // pred_check_branch
      %15 = sbr.rel (0) target = $region5
    $region4: #{tpu_custom_call.1} parent=1 // pred_region
      %s17 = ssub.s32 896, 896
      %18 = vsyncadd [#allocation3], %s17
      %s20 = sshll.u32 [#allocation2], 4
      %s21 = int_to_ptr.vmem [resolvable:$true] %s20
      %23 = dma.hbm_to_vmem [thread:$0]  %s0, 896, %s21, [#allocation3]
    $region5: #{tpu_custom_call.1} parent=1 // pred_fallthru
      _
    // Predicated region
    $region6: #{tpu_custom_call.1} parent=1 // pred_check
      _
    $region7: #{tpu_custom_call.1} parent=1 // pred_check_branch
      %25 = sbr.rel (0) target = $region9
    $region8: #{tpu_custom_call.1} parent=1 // pred_region
      %s27 = ssub.s32 62720, 62720
      %28 = vsyncadd [#allocation6], %s27
      %s29 = sshll.u32 [#allocation5], 4
      %s30 = int_to_ptr.vmem [resolvable:$true] %s29
      %35 = dma.hbm_to_vmem [thread:$0]  %s1, 62720, %s30, [#allocation6], 640, 640, 40
    $region9: #{tpu_custom_call.1} parent=1 // pred_fallthru
      _
    // Predicated region
    $region10: #{tpu_custom_call.1} parent=1 // pred_check
      _
    $region11: #{tpu_custom_call.1} parent=1 // pred_check_branch
      %37 = sbr.rel (0) target = $region13
    $region12: #{tpu_custom_call.1} parent=1 // pred_region
      %s39 = ssub.s32 80, 80
      %40 = vsyncadd [#allocation6], %s39
      %s42 = sshll.u32 [#allocation7], 4
      %s43 = int_to_ptr.vmem [resolvable:$true] %s42
      %45 = dma.hbm_to_vmem [thread:$0]  %s2, 80, %s43, [#allocation6]
    $region13: #{tpu_custom_call.1} parent=1 // pred_fallthru
      _
    // Predicated region
    $region14: #{tpu_custom_call.1} parent=1 // pred_check
      _
    $region15: #{tpu_custom_call.1} parent=1 // pred_check_branch
      %47 = sbr.rel (0) target = $region17
    $region16: #{tpu_custom_call.1} parent=1 // pred_region
      %s49 = ssub.s32 10240, 10240
      %50 = vsyncadd [#allocation9], %s49
      %s51 = sshll.u32 [#allocation8], 4
      %s52 = int_to_ptr.vmem [resolvable:$true] %s51
      %57 = dma.hbm_to_vmem [thread:$0]  %s3, 10240, %s52, [#allocation9], 128, 128, 8
    $region17: #{tpu_custom_call.1} parent=1 // pred_fallthru
      _
    // Predicated region
    $region18: #{tpu_custom_call.1} parent=1 // pred_check
      _
    $region19: #{tpu_custom_call.1} parent=1 // pred_check_branch
      %59 = sbr.rel (0) target = $region21
    $region20: #{tpu_custom_call.1} parent=1 // pred_region
      %s61 = ssub.s32 16, 16
      %62 = vsyncadd [#allocation9], %s61
      %s64 = sshll.u32 [#allocation10], 4
      %s65 = int_to_ptr.vmem [resolvable:$true] %s64
      %67 = dma.hbm_to_vmem [thread:$0]  %s4, 16, %s65, [#allocation9]
    $region21: #{tpu_custom_call.1} parent=1 // pred_fallthru
      _
    // Predicated region
    $region22: #{tpu_custom_call.1} parent=1 // pred_check
      _
    $region23: #{tpu_custom_call.1} parent=1 // pred_check_branch
      %69 = sbr.rel (0) target = $region25
    $region24: #{tpu_custom_call.1} parent=1 // pred_region
      %70 = dma.done [#allocation3], 896
    $region25: #{tpu_custom_call.1} parent=1 // pred_fallthru
      _
    // Predicated region
    $region26: #{tpu_custom_call.1} parent=1 // pred_check
      _
    $region27: #{tpu_custom_call.1} parent=1 // pred_check_branch
      %72 = sbr.rel (0) target = $region29
    $region28: #{tpu_custom_call.1} parent=1 // pred_region
      %73 = dma.done [#allocation6], 62720
    $region29: #{tpu_custom_call.1} parent=1 // pred_fallthru
      _
    // Predicated region
    $region30: #{tpu_custom_call.1} parent=1 // pred_check
      _
    $region31: #{tpu_custom_call.1} parent=1 // pred_check_branch
      %75 = sbr.rel (0) target = $region33
    $region32: #{tpu_custom_call.1} parent=1 // pred_region
      %76 = dma.done [#allocation6], 80
    $region33: #{tpu_custom_call.1} parent=1 // pred_fallthru
      _
    // Predicated region
    $region34: #{tpu_custom_call.1} parent=1 // pred_check
      _
    $region35: #{tpu_custom_call.1} parent=1 // pred_check_branch
      %78 = sbr.rel (0) target = $region37
    $region36: #{tpu_custom_call.1} parent=1 // pred_region
      %79 = dma.done [#allocation9], 10240
    $region37: #{tpu_custom_call.1} parent=1 // pred_fallthru
      _
    // Predicated region
    $region38: #{tpu_custom_call.1} parent=1 // pred_check
      _
    $region39: #{tpu_custom_call.1} parent=1 // pred_check_branch
      %81 = sbr.rel (0) target = $region41
    $region40: #{tpu_custom_call.1} parent=1 // pred_region
      %82 = dma.done [#allocation9], 16
    $region41: #{tpu_custom_call.1} parent=1 // pred_fallthru
      _
    %v83 = vld [vmem:[#allocation2] sm:$0xff]
    %v84 = vld [vmem:[#allocation2 + $0x8] sm:$0xff]
    %v85 = vld [vmem:[#allocation2 + $0x10] sm:$0xff]
    %v86 = vld [vmem:[#allocation2 + $0x18] sm:$0xff]
    %v87 = vld [vmem:[#allocation2 + $0x20] sm:$0xff]
    %v88 = vld [vmem:[#allocation2 + $0x28] sm:$0xff]
    %v89 = vld [vmem:[#allocation2 + $0x30] sm:$0xff]
    %v90 = vld [vmem:[#allocation5] sm:$0xff]
    %v91 = vld [vmem:[#allocation5 + $0x8] sm:$0xff]
    %v92 = vld [vmem:[#allocation5 + $0x10] sm:$0xff]
    %v93 = vld [vmem:[#allocation5 + $0x18] sm:$0xff]
    %v94 = vld [vmem:[#allocation5 + $0x20] sm:$0xff]
    %v95 = vld [vmem:[#allocation5 + $0x28] sm:$0xff]
    %v96 = vld [vmem:[#allocation5 + $0x30] sm:$0xff]
    %v97 = vld [vmem:[#allocation5 + $0x38] sm:$0xff]
    %v98 = vld [vmem:[#allocation5 + $0x40] sm:$0xff]
    %v99 = vld [vmem:[#allocation5 + $0x48] sm:$0xff]
    %v100 = vld [vmem:[#allocation5 + $0x50] sm:$0xff]
    %v101 = vld [vmem:[#allocation5 + $0x58] sm:$0xff]
    %v102 = vld [vmem:[#allocation5 + $0x60] sm:$0xff]
    %v103 = vld [vmem:[#allocation5 + $0x68] sm:$0xff]
    %v104 = vld [vmem:[#allocation5 + $0x70] sm:$0xff]
    %v105 = vld [vmem:[#allocation5 + $0x78] sm:$0xff]
    %v106 = vld [vmem:[#allocation5 + $0x80] sm:$0xff]
    %v107 = vld [vmem:[#allocation5 + $0x88] sm:$0xff]
    %v108 = vld [vmem:[#allocation5 + $0x90] sm:$0xff]
    %v109 = vld [vmem:[#allocation5 + $0x98] sm:$0xff]
    %v110 = vld [vmem:[#allocation5 + $0xa0] sm:$0xff]
    %v111 = vld [vmem:[#allocation5 + $0xa8] sm:$0xff]
    %v112 = vld [vmem:[#allocation5 + $0xb0] sm:$0xff]
    %v113 = vld [vmem:[#allocation5 + $0xb8] sm:$0xff]
    %v114 = vld [vmem:[#allocation5 + $0xc0] sm:$0xff]
    %v115 = vld [vmem:[#allocation5 + $0xc8] sm:$0xff]
    %v116 = vld [vmem:[#allocation5 + $0xd0] sm:$0xff]
    %v117 = vld [vmem:[#allocation5 + $0xd8] sm:$0xff]
    %v118 = vld [vmem:[#allocation5 + $0xe0] sm:$0xff]
    %v119 = vld [vmem:[#allocation5 + $0xe8] sm:$0xff]
    %v120 = vld [vmem:[#allocation5 + $0xf0] sm:$0xff]
    %v121 = vld [vmem:[#allocation5 + $0xf8] sm:$0xff]
    %v122 = vld [vmem:[#allocation5 + $0x100] sm:$0xff]
    %v123 = vld [vmem:[#allocation5 + $0x108] sm:$0xff]
    %v124 = vld [vmem:[#allocation5 + $0x110] sm:$0xff]
    %v125 = vld [vmem:[#allocation5 + $0x118] sm:$0xff]
    %v126 = vld [vmem:[#allocation5 + $0x120] sm:$0xff]
    %v127 = vld [vmem:[#allocation5 + $0x128] sm:$0xff]
    %v128 = vld [vmem:[#allocation5 + $0x130] sm:$0xff]
    %v129 = vld [vmem:[#allocation5 + $0x138] sm:$0xff]
    %v130 = vld [vmem:[#allocation5 + $0x140] sm:$0xff]
    %v131 = vld [vmem:[#allocation5 + $0x148] sm:$0xff]
    %v132 = vld [vmem:[#allocation5 + $0x150] sm:$0xff]
    %v133 = vld [vmem:[#allocation5 + $0x158] sm:$0xff]
    %v134 = vld [vmem:[#allocation5 + $0x160] sm:$0xff]
    %v135 = vld [vmem:[#allocation5 + $0x168] sm:$0xff]
    %v136 = vld [vmem:[#allocation5 + $0x170] sm:$0xff]
    %v137 = vld [vmem:[#allocation5 + $0x178] sm:$0xff]
    %v138 = vld [vmem:[#allocation5 + $0x180] sm:$0xff]
    %v139 = vld [vmem:[#allocation5 + $0x188] sm:$0xff]
    %v140 = vld [vmem:[#allocation5 + $0x190] sm:$0xff]
    %v141 = vld [vmem:[#allocation5 + $0x198] sm:$0xff]
    %v142 = vld [vmem:[#allocation5 + $0x1a0] sm:$0xff]
    %v143 = vld [vmem:[#allocation5 + $0x1a8] sm:$0xff]
    %v144 = vld [vmem:[#allocation5 + $0x1b0] sm:$0xff]
    %v145 = vld [vmem:[#allocation5 + $0x1b8] sm:$0xff]
    %v146 = vld [vmem:[#allocation5 + $0x1c0] sm:$0xff]
    %v147 = vld [vmem:[#allocation5 + $0x1c8] sm:$0xff]
    %v148 = vld [vmem:[#allocation5 + $0x1d0] sm:$0xff]
    %v149 = vld [vmem:[#allocation5 + $0x1d8] sm:$0xff]
    %v150 = vld [vmem:[#allocation5 + $0x1e0] sm:$0xff]
    %v151 = vld [vmem:[#allocation5 + $0x1e8] sm:$0xff]
    %v152 = vld [vmem:[#allocation5 + $0x1f0] sm:$0xff]
    %v153 = vld [vmem:[#allocation5 + $0x1f8] sm:$0xff]
    %v154 = vld [vmem:[#allocation5 + $0x200] sm:$0xff]
    %v155 = vld [vmem:[#allocation5 + $0x208] sm:$0xff]
    %v156 = vld [vmem:[#allocation5 + $0x210] sm:$0xff]
    %v157 = vld [vmem:[#allocation5 + $0x218] sm:$0xff]
    %v158 = vld [vmem:[#allocation5 + $0x220] sm:$0xff]
    %v159 = vld [vmem:[#allocation5 + $0x228] sm:$0xff]
    %v160 = vld [vmem:[#allocation5 + $0x230] sm:$0xff]
    %v161 = vld [vmem:[#allocation5 + $0x238] sm:$0xff]
    %v162 = vld [vmem:[#allocation5 + $0x240] sm:$0xff]
    %v163 = vld [vmem:[#allocation5 + $0x248] sm:$0xff]
    %v164 = vld [vmem:[#allocation5 + $0x250] sm:$0xff]
    %v165 = vld [vmem:[#allocation5 + $0x258] sm:$0xff]
    %v166 = vld [vmem:[#allocation5 + $0x260] sm:$0xff]
    %v167 = vld [vmem:[#allocation5 + $0x268] sm:$0xff]
    %v168 = vld [vmem:[#allocation5 + $0x270] sm:$0xff]
    %v169 = vld [vmem:[#allocation5 + $0x278] sm:$0xff]
    %v170 = vld [vmem:[#allocation5 + $0x280] sm:$0xff]
    %v171 = vld [vmem:[#allocation5 + $0x288] sm:$0xff]
    %v172 = vld [vmem:[#allocation5 + $0x290] sm:$0xff]
    %v173 = vld [vmem:[#allocation5 + $0x298] sm:$0xff]
    %v174 = vld [vmem:[#allocation5 + $0x2a0] sm:$0xff]
    %v175 = vld [vmem:[#allocation5 + $0x2a8] sm:$0xff]
    %v176 = vld [vmem:[#allocation5 + $0x2b0] sm:$0xff]
    %v177 = vld [vmem:[#allocation5 + $0x2b8] sm:$0xff]
    %v178 = vld [vmem:[#allocation5 + $0x2c0] sm:$0xff]
    %v179 = vld [vmem:[#allocation5 + $0x2c8] sm:$0xff]
    %v180 = vld [vmem:[#allocation5 + $0x2d0] sm:$0xff]
    %v181 = vld [vmem:[#allocation5 + $0x2d8] sm:$0xff]
    %v182 = vld [vmem:[#allocation5 + $0x2e0] sm:$0xff]
    %v183 = vld [vmem:[#allocation5 + $0x2e8] sm:$0xff]
    %v184 = vld [vmem:[#allocation5 + $0x2f0] sm:$0xff]
    %v185 = vld [vmem:[#allocation5 + $0x2f8] sm:$0xff]
    %v186 = vld [vmem:[#allocation5 + $0x300] sm:$0xff]
    %v187 = vld [vmem:[#allocation5 + $0x308] sm:$0xff]
    %v188 = vld [vmem:[#allocation5 + $0x310] sm:$0xff]
    %v189 = vld [vmem:[#allocation5 + $0x318] sm:$0xff]
    %v190 = vld [vmem:[#allocation5 + $0x320] sm:$0xff]
    %v191 = vld [vmem:[#allocation5 + $0x328] sm:$0xff]
    %v192 = vld [vmem:[#allocation5 + $0x330] sm:$0xff]
    %v193 = vld [vmem:[#allocation5 + $0x338] sm:$0xff]
    %v194 = vld [vmem:[#allocation5 + $0x340] sm:$0xff]
    %v195 = vld [vmem:[#allocation5 + $0x348] sm:$0xff]
    %v196 = vld [vmem:[#allocation5 + $0x350] sm:$0xff]
    %v197 = vld [vmem:[#allocation5 + $0x358] sm:$0xff]
    %v198 = vld [vmem:[#allocation5 + $0x360] sm:$0xff]
    %v199 = vld [vmem:[#allocation5 + $0x368] sm:$0xff]
    %v200 = vld [vmem:[#allocation5 + $0x370] sm:$0xff]
    %v201 = vld [vmem:[#allocation5 + $0x378] sm:$0xff]
    %v202 = vld [vmem:[#allocation5 + $0x380] sm:$0xff]
    %v203 = vld [vmem:[#allocation5 + $0x388] sm:$0xff]
    %v204 = vld [vmem:[#allocation5 + $0x390] sm:$0xff]
    %v205 = vld [vmem:[#allocation5 + $0x398] sm:$0xff]
    %v206 = vld [vmem:[#allocation5 + $0x3a0] sm:$0xff]
    %v207 = vld [vmem:[#allocation5 + $0x3a8] sm:$0xff]
    %v208 = vld [vmem:[#allocation5 + $0x3b0] sm:$0xff]
    %v209 = vld [vmem:[#allocation5 + $0x3b8] sm:$0xff]
    %v210 = vld [vmem:[#allocation5 + $0x3c0] sm:$0xff]
    %v211 = vld [vmem:[#allocation5 + $0x3c8] sm:$0xff]
    %v212 = vld [vmem:[#allocation5 + $0x3d0] sm:$0xff]
    %v213 = vld [vmem:[#allocation5 + $0x3d8] sm:$0xff]
    %v214 = vld [vmem:[#allocation5 + $0x3e0] sm:$0xff]
    %v215 = vld [vmem:[#allocation5 + $0x3e8] sm:$0xff]
    %v216 = vld [vmem:[#allocation5 + $0x3f0] sm:$0xff]
    %v217 = vld [vmem:[#allocation5 + $0x3f8] sm:$0xff]
    %v218 = vld [vmem:[#allocation5 + $0x400] sm:$0xff]
    %v219 = vld [vmem:[#allocation5 + $0x408] sm:$0xff]
    %v220 = vld [vmem:[#allocation5 + $0x410] sm:$0xff]
    %v221 = vld [vmem:[#allocation5 + $0x418] sm:$0xff]
    %v222 = vld [vmem:[#allocation5 + $0x420] sm:$0xff]
    %v223 = vld [vmem:[#allocation5 + $0x428] sm:$0xff]
    %v224 = vld [vmem:[#allocation5 + $0x430] sm:$0xff]
    %v225 = vld [vmem:[#allocation5 + $0x438] sm:$0xff]
    %v226 = vld [vmem:[#allocation5 + $0x440] sm:$0xff]
    %v227 = vld [vmem:[#allocation5 + $0x448] sm:$0xff]
    %v228 = vld [vmem:[#allocation5 + $0x450] sm:$0xff]
    %v229 = vld [vmem:[#allocation5 + $0x458] sm:$0xff]
    %v230 = vld [vmem:[#allocation5 + $0x460] sm:$0xff]
    %v231 = vld [vmem:[#allocation5 + $0x468] sm:$0xff]
    %v232 = vld [vmem:[#allocation5 + $0x470] sm:$0xff]
    %v233 = vld [vmem:[#allocation5 + $0x478] sm:$0xff]
    %v234 = vld [vmem:[#allocation5 + $0x480] sm:$0xff]
    %v235 = vld [vmem:[#allocation5 + $0x488] sm:$0xff]
    %v236 = vld [vmem:[#allocation5 + $0x490] sm:$0xff]
    %v237 = vld [vmem:[#allocation5 + $0x498] sm:$0xff]
    %v238 = vld [vmem:[#allocation5 + $0x4a0] sm:$0xff]
    %v239 = vld [vmem:[#allocation5 + $0x4a8] sm:$0xff]
    %v240 = vld [vmem:[#allocation5 + $0x4b0] sm:$0xff]
    %v241 = vld [vmem:[#allocation5 + $0x4b8] sm:$0xff]
    %v242 = vld [vmem:[#allocation5 + $0x4c0] sm:$0xff]
    %v243 = vld [vmem:[#allocation5 + $0x4c8] sm:$0xff]
    %v244 = vld [vmem:[#allocation5 + $0x4d0] sm:$0xff]
    %v245 = vld [vmem:[#allocation5 + $0x4d8] sm:$0xff]
    %v246 = vld [vmem:[#allocation5 + $0x4e0] sm:$0xff]
    %v247 = vld [vmem:[#allocation5 + $0x4e8] sm:$0xff]
    %v248 = vld [vmem:[#allocation5 + $0x4f0] sm:$0xff]
    %v249 = vld [vmem:[#allocation5 + $0x4f8] sm:$0xff]
    %v250 = vld [vmem:[#allocation5 + $0x500] sm:$0xff]
    %v251 = vld [vmem:[#allocation5 + $0x508] sm:$0xff]
    %v252 = vld [vmem:[#allocation5 + $0x510] sm:$0xff]
    %v253 = vld [vmem:[#allocation5 + $0x518] sm:$0xff]
    %v254 = vld [vmem:[#allocation5 + $0x520] sm:$0xff]
    %v255 = vld [vmem:[#allocation5 + $0x528] sm:$0xff]
    %v256 = vld [vmem:[#allocation5 + $0x530] sm:$0xff]
    %v257 = vld [vmem:[#allocation5 + $0x538] sm:$0xff]
    %v258 = vld [vmem:[#allocation5 + $0x540] sm:$0xff]
    %v259 = vld [vmem:[#allocation5 + $0x548] sm:$0xff]
    %v260 = vld [vmem:[#allocation5 + $0x550] sm:$0xff]
    %v261 = vld [vmem:[#allocation5 + $0x558] sm:$0xff]
    %v262 = vld [vmem:[#allocation5 + $0x560] sm:$0xff]
    %v263 = vld [vmem:[#allocation5 + $0x568] sm:$0xff]
    %v264 = vld [vmem:[#allocation5 + $0x570] sm:$0xff]
    %v265 = vld [vmem:[#allocation5 + $0x578] sm:$0xff]
    %v266 = vld [vmem:[#allocation5 + $0x580] sm:$0xff]
    %v267 = vld [vmem:[#allocation5 + $0x588] sm:$0xff]
    %v268 = vld [vmem:[#allocation5 + $0x590] sm:$0xff]
    %v269 = vld [vmem:[#allocation5 + $0x598] sm:$0xff]
    %v270 = vld [vmem:[#allocation5 + $0x5a0] sm:$0xff]
    %v271 = vld [vmem:[#allocation5 + $0x5a8] sm:$0xff]
    %v272 = vld [vmem:[#allocation5 + $0x5b0] sm:$0xff]
    %v273 = vld [vmem:[#allocation5 + $0x5b8] sm:$0xff]
    %v274 = vld [vmem:[#allocation5 + $0x5c0] sm:$0xff]
    %v275 = vld [vmem:[#allocation5 + $0x5c8] sm:$0xff]
    %v276 = vld [vmem:[#allocation5 + $0x5d0] sm:$0xff]
    %v277 = vld [vmem:[#allocation5 + $0x5d8] sm:$0xff]
    %v278 = vld [vmem:[#allocation5 + $0x5e0] sm:$0xff]
    %v279 = vld [vmem:[#allocation5 + $0x5e8] sm:$0xff]
    %v280 = vld [vmem:[#allocation5 + $0x5f0] sm:$0xff]
    %v281 = vld [vmem:[#allocation5 + $0x5f8] sm:$0xff]
    %v282 = vld [vmem:[#allocation5 + $0x600] sm:$0xff]
    %v283 = vld [vmem:[#allocation5 + $0x608] sm:$0xff]
    %v284 = vld [vmem:[#allocation5 + $0x610] sm:$0xff]
    %v285 = vld [vmem:[#allocation5 + $0x618] sm:$0xff]
    %v286 = vld [vmem:[#allocation5 + $0x620] sm:$0xff]
    %v287 = vld [vmem:[#allocation5 + $0x628] sm:$0xff]
    %v288 = vld [vmem:[#allocation5 + $0x630] sm:$0xff]
    %v289 = vld [vmem:[#allocation5 + $0x638] sm:$0xff]
    %v290 = vld [vmem:[#allocation5 + $0x640] sm:$0xff]
    %v291 = vld [vmem:[#allocation5 + $0x648] sm:$0xff]
    %v292 = vld [vmem:[#allocation5 + $0x650] sm:$0xff]
    %v293 = vld [vmem:[#allocation5 + $0x658] sm:$0xff]
    %v294 = vld [vmem:[#allocation5 + $0x660] sm:$0xff]
    %v295 = vld [vmem:[#allocation5 + $0x668] sm:$0xff]
    %v296 = vld [vmem:[#allocation5 + $0x670] sm:$0xff]
    %v297 = vld [vmem:[#allocation5 + $0x678] sm:$0xff]
    %v298 = vld [vmem:[#allocation5 + $0x680] sm:$0xff]
    %v299 = vld [vmem:[#allocation5 + $0x688] sm:$0xff]
    %v300 = vld [vmem:[#allocation5 + $0x690] sm:$0xff]
    %v301 = vld [vmem:[#allocation5 + $0x698] sm:$0xff]
    %v302 = vld [vmem:[#allocation5 + $0x6a0] sm:$0xff]
    %v303 = vld [vmem:[#allocation5 + $0x6a8] sm:$0xff]
    %v304 = vld [vmem:[#allocation5 + $0x6b0] sm:$0xff]
    %v305 = vld [vmem:[#allocation5 + $0x6b8] sm:$0xff]
    %v306 = vld [vmem:[#allocation5 + $0x6c0] sm:$0xff]
    %v307 = vld [vmem:[#allocation5 + $0x6c8] sm:$0xff]
    %v308 = vld [vmem:[#allocation5 + $0x6d0] sm:$0xff]
    %v309 = vld [vmem:[#allocation5 + $0x6d8] sm:$0xff]
    %v310 = vld [vmem:[#allocation5 + $0x6e0] sm:$0xff]
    %v311 = vld [vmem:[#allocation5 + $0x6e8] sm:$0xff]
    %v312 = vld [vmem:[#allocation5 + $0x6f0] sm:$0xff]
    %v313 = vld [vmem:[#allocation5 + $0x6f8] sm:$0xff]
    %v314 = vld [vmem:[#allocation5 + $0x700] sm:$0xff]
    %v315 = vld [vmem:[#allocation5 + $0x708] sm:$0xff]
    %v316 = vld [vmem:[#allocation5 + $0x710] sm:$0xff]
    %v317 = vld [vmem:[#allocation5 + $0x718] sm:$0xff]
    %v318 = vld [vmem:[#allocation5 + $0x720] sm:$0xff]
    %v319 = vld [vmem:[#allocation5 + $0x728] sm:$0xff]
    %v320 = vld [vmem:[#allocation5 + $0x730] sm:$0xff]
    %v321 = vld [vmem:[#allocation5 + $0x738] sm:$0xff]
    %v322 = vld [vmem:[#allocation5 + $0x740] sm:$0xff]
    %v323 = vld [vmem:[#allocation5 + $0x748] sm:$0xff]
    %v324 = vld [vmem:[#allocation5 + $0x750] sm:$0xff]
    %v325 = vld [vmem:[#allocation5 + $0x758] sm:$0xff]
    %v326 = vld [vmem:[#allocation5 + $0x760] sm:$0xff]
    %v327 = vld [vmem:[#allocation5 + $0x768] sm:$0xff]
    %v328 = vld [vmem:[#allocation5 + $0x770] sm:$0xff]
    %v329 = vld [vmem:[#allocation5 + $0x778] sm:$0xff]
    %v330 = vld [vmem:[#allocation5 + $0x780] sm:$0xff]
    %v331 = vld [vmem:[#allocation5 + $0x788] sm:$0xff]
    %v332 = vld [vmem:[#allocation5 + $0x790] sm:$0xff]
    %v333 = vld [vmem:[#allocation5 + $0x798] sm:$0xff]
    %v334 = vld [vmem:[#allocation5 + $0x7a0] sm:$0xff]
    %v335 = vld [vmem:[#allocation5 + $0x7a8] sm:$0xff]
    %v336 = vld [vmem:[#allocation5 + $0x7b0] sm:$0xff]
    %v337 = vld [vmem:[#allocation5 + $0x7b8] sm:$0xff]
    %v338 = vld [vmem:[#allocation5 + $0x7c0] sm:$0xff]
    %v339 = vld [vmem:[#allocation5 + $0x7c8] sm:$0xff]
    %v340 = vld [vmem:[#allocation5 + $0x7d0] sm:$0xff]
    %v341 = vld [vmem:[#allocation5 + $0x7d8] sm:$0xff]
    %v342 = vld [vmem:[#allocation5 + $0x7e0] sm:$0xff]
    %v343 = vld [vmem:[#allocation5 + $0x7e8] sm:$0xff]
    %v344 = vld [vmem:[#allocation5 + $0x7f0] sm:$0xff]
    %v345 = vld [vmem:[#allocation5 + $0x7f8] sm:$0xff]
    %v346 = vld [vmem:[#allocation5 + $0x800] sm:$0xff]
    %v347 = vld [vmem:[#allocation5 + $0x808] sm:$0xff]
    %v348 = vld [vmem:[#allocation5 + $0x810] sm:$0xff]
    %v349 = vld [vmem:[#allocation5 + $0x818] sm:$0xff]
    %v350 = vld [vmem:[#allocation5 + $0x820] sm:$0xff]
    %v351 = vld [vmem:[#allocation5 + $0x828] sm:$0xff]
    %v352 = vld [vmem:[#allocation5 + $0x830] sm:$0xff]
    %v353 = vld [vmem:[#allocation5 + $0x838] sm:$0xff]
    %v354 = vld [vmem:[#allocation5 + $0x840] sm:$0xff]
    %v355 = vld [vmem:[#allocation5 + $0x848] sm:$0xff]
    %v356 = vld [vmem:[#allocation5 + $0x850] sm:$0xff]
    %v357 = vld [vmem:[#allocation5 + $0x858] sm:$0xff]
    %v358 = vld [vmem:[#allocation5 + $0x860] sm:$0xff]
    %v359 = vld [vmem:[#allocation5 + $0x868] sm:$0xff]
    %v360 = vld [vmem:[#allocation5 + $0x870] sm:$0xff]
    %v361 = vld [vmem:[#allocation5 + $0x878] sm:$0xff]
    %v362 = vld [vmem:[#allocation5 + $0x880] sm:$0xff]
    %v363 = vld [vmem:[#allocation5 + $0x888] sm:$0xff]
    %v364 = vld [vmem:[#allocation5 + $0x890] sm:$0xff]
    %v365 = vld [vmem:[#allocation5 + $0x898] sm:$0xff]
    %v366 = vld [vmem:[#allocation5 + $0x8a0] sm:$0xff]
    %v367 = vld [vmem:[#allocation5 + $0x8a8] sm:$0xff]
    %v368 = vld [vmem:[#allocation5 + $0x8b0] sm:$0xff]
    %v369 = vld [vmem:[#allocation5 + $0x8b8] sm:$0xff]
    %v370 = vld [vmem:[#allocation5 + $0x8c0] sm:$0xff]
    %v371 = vld [vmem:[#allocation5 + $0x8c8] sm:$0xff]
    %v372 = vld [vmem:[#allocation5 + $0x8d0] sm:$0xff]
    %v373 = vld [vmem:[#allocation5 + $0x8d8] sm:$0xff]
    %v374 = vld [vmem:[#allocation5 + $0x8e0] sm:$0xff]
    %v375 = vld [vmem:[#allocation5 + $0x8e8] sm:$0xff]
    %v376 = vld [vmem:[#allocation5 + $0x8f0] sm:$0xff]
    %v377 = vld [vmem:[#allocation5 + $0x8f8] sm:$0xff]
    %v378 = vld [vmem:[#allocation5 + $0x900] sm:$0xff]
    %v379 = vld [vmem:[#allocation5 + $0x908] sm:$0xff]
    %v380 = vld [vmem:[#allocation5 + $0x910] sm:$0xff]
    %v381 = vld [vmem:[#allocation5 + $0x918] sm:$0xff]
    %v382 = vld [vmem:[#allocation5 + $0x920] sm:$0xff]
    %v383 = vld [vmem:[#allocation5 + $0x928] sm:$0xff]
    %v384 = vld [vmem:[#allocation5 + $0x930] sm:$0xff]
    %v385 = vld [vmem:[#allocation5 + $0x938] sm:$0xff]
    %v386 = vld [vmem:[#allocation5 + $0x940] sm:$0xff]
    %v387 = vld [vmem:[#allocation5 + $0x948] sm:$0xff]
    %v388 = vld [vmem:[#allocation5 + $0x950] sm:$0xff]
    %v389 = vld [vmem:[#allocation5 + $0x958] sm:$0xff]
    %v390 = vld [vmem:[#allocation5 + $0x960] sm:$0xff]
    %v391 = vld [vmem:[#allocation5 + $0x968] sm:$0xff]
    %v392 = vld [vmem:[#allocation5 + $0x970] sm:$0xff]
    %v393 = vld [vmem:[#allocation5 + $0x978] sm:$0xff]
    %v394 = vld [vmem:[#allocation5 + $0x980] sm:$0xff]
    %v395 = vld [vmem:[#allocation5 + $0x988] sm:$0xff]
    %v396 = vld [vmem:[#allocation5 + $0x990] sm:$0xff]
    %v397 = vld [vmem:[#allocation5 + $0x998] sm:$0xff]
    %v398 = vld [vmem:[#allocation5 + $0x9a0] sm:$0xff]
    %v399 = vld [vmem:[#allocation5 + $0x9a8] sm:$0xff]
    %v400 = vld [vmem:[#allocation5 + $0x9b0] sm:$0xff]
    %v401 = vld [vmem:[#allocation5 + $0x9b8] sm:$0xff]
    %v402 = vld [vmem:[#allocation5 + $0x9c0] sm:$0xff]
    %v403 = vld [vmem:[#allocation5 + $0x9c8] sm:$0xff]
    %v404 = vld [vmem:[#allocation5 + $0x9d0] sm:$0xff]
    %v405 = vld [vmem:[#allocation5 + $0x9d8] sm:$0xff]
    %v406 = vld [vmem:[#allocation5 + $0x9e0] sm:$0xff]
    %v407 = vld [vmem:[#allocation5 + $0x9e8] sm:$0xff]
    %v408 = vld [vmem:[#allocation5 + $0x9f0] sm:$0xff]
    %v409 = vld [vmem:[#allocation5 + $0x9f8] sm:$0xff]
    %v410 = vld [vmem:[#allocation5 + $0xa00] sm:$0xff]
    %v411 = vld [vmem:[#allocation5 + $0xa08] sm:$0xff]
    %v412 = vld [vmem:[#allocation5 + $0xa10] sm:$0xff]
    %v413 = vld [vmem:[#allocation5 + $0xa18] sm:$0xff]
    %v414 = vld [vmem:[#allocation5 + $0xa20] sm:$0xff]
    %v415 = vld [vmem:[#allocation5 + $0xa28] sm:$0xff]
    %v416 = vld [vmem:[#allocation5 + $0xa30] sm:$0xff]
    %v417 = vld [vmem:[#allocation5 + $0xa38] sm:$0xff]
    %v418 = vld [vmem:[#allocation5 + $0xa40] sm:$0xff]
    %v419 = vld [vmem:[#allocation5 + $0xa48] sm:$0xff]
    %v420 = vld [vmem:[#allocation5 + $0xa50] sm:$0xff]
    %v421 = vld [vmem:[#allocation5 + $0xa58] sm:$0xff]
    %v422 = vld [vmem:[#allocation5 + $0xa60] sm:$0xff]
    %v423 = vld [vmem:[#allocation5 + $0xa68] sm:$0xff]
    %v424 = vld [vmem:[#allocation5 + $0xa70] sm:$0xff]
    %v425 = vld [vmem:[#allocation5 + $0xa78] sm:$0xff]
    %v426 = vld [vmem:[#allocation5 + $0xa80] sm:$0xff]
    %v427 = vld [vmem:[#allocation5 + $0xa88] sm:$0xff]
    %v428 = vld [vmem:[#allocation5 + $0xa90] sm:$0xff]
    %v429 = vld [vmem:[#allocation5 + $0xa98] sm:$0xff]
    %v430 = vld [vmem:[#allocation5 + $0xaa0] sm:$0xff]
    %v431 = vld [vmem:[#allocation5 + $0xaa8] sm:$0xff]
    %v432 = vld [vmem:[#allocation5 + $0xab0] sm:$0xff]
    %v433 = vld [vmem:[#allocation5 + $0xab8] sm:$0xff]
    %v434 = vld [vmem:[#allocation5 + $0xac0] sm:$0xff]
    %v435 = vld [vmem:[#allocation5 + $0xac8] sm:$0xff]
    %v436 = vld [vmem:[#allocation5 + $0xad0] sm:$0xff]
    %v437 = vld [vmem:[#allocation5 + $0xad8] sm:$0xff]
    %v438 = vld [vmem:[#allocation5 + $0xae0] sm:$0xff]
    %v439 = vld [vmem:[#allocation5 + $0xae8] sm:$0xff]
    %v440 = vld [vmem:[#allocation5 + $0xaf0] sm:$0xff]
    %v441 = vld [vmem:[#allocation5 + $0xaf8] sm:$0xff]
    %v442 = vld [vmem:[#allocation5 + $0xb00] sm:$0xff]
    %v443 = vld [vmem:[#allocation5 + $0xb08] sm:$0xff]
    %v444 = vld [vmem:[#allocation5 + $0xb10] sm:$0xff]
    %v445 = vld [vmem:[#allocation5 + $0xb18] sm:$0xff]
    %v446 = vld [vmem:[#allocation5 + $0xb20] sm:$0xff]
    %v447 = vld [vmem:[#allocation5 + $0xb28] sm:$0xff]
    %v448 = vld [vmem:[#allocation5 + $0xb30] sm:$0xff]
    %v449 = vld [vmem:[#allocation5 + $0xb38] sm:$0xff]
    %v450 = vld [vmem:[#allocation5 + $0xb40] sm:$0xff]
    %v451 = vld [vmem:[#allocation5 + $0xb48] sm:$0xff]
    %v452 = vld [vmem:[#allocation5 + $0xb50] sm:$0xff]
    %v453 = vld [vmem:[#allocation5 + $0xb58] sm:$0xff]
    %v454 = vld [vmem:[#allocation5 + $0xb60] sm:$0xff]
    %v455 = vld [vmem:[#allocation5 + $0xb68] sm:$0xff]
    %v456 = vld [vmem:[#allocation5 + $0xb70] sm:$0xff]
    %v457 = vld [vmem:[#allocation5 + $0xb78] sm:$0xff]
    %v458 = vld [vmem:[#allocation5 + $0xb80] sm:$0xff]
    %v459 = vld [vmem:[#allocation5 + $0xb88] sm:$0xff]
    %v460 = vld [vmem:[#allocation5 + $0xb90] sm:$0xff]
    %v461 = vld [vmem:[#allocation5 + $0xb98] sm:$0xff]
    %v462 = vld [vmem:[#allocation5 + $0xba0] sm:$0xff]
    %v463 = vld [vmem:[#allocation5 + $0xba8] sm:$0xff]
    %v464 = vld [vmem:[#allocation5 + $0xbb0] sm:$0xff]
    %v465 = vld [vmem:[#allocation5 + $0xbb8] sm:$0xff]
    %v466 = vld [vmem:[#allocation5 + $0xbc0] sm:$0xff]
    %v467 = vld [vmem:[#allocation5 + $0xbc8] sm:$0xff]
    %v468 = vld [vmem:[#allocation5 + $0xbd0] sm:$0xff]
    %v469 = vld [vmem:[#allocation5 + $0xbd8] sm:$0xff]
    %v470 = vld [vmem:[#allocation5 + $0xbe0] sm:$0xff]
    %v471 = vld [vmem:[#allocation5 + $0xbe8] sm:$0xff]
    %v472 = vld [vmem:[#allocation5 + $0xbf0] sm:$0xff]
    %v473 = vld [vmem:[#allocation5 + $0xbf8] sm:$0xff]
    %v474 = vld [vmem:[#allocation5 + $0xc00] sm:$0xff]
    %v475 = vld [vmem:[#allocation5 + $0xc08] sm:$0xff]
    %v476 = vld [vmem:[#allocation5 + $0xc10] sm:$0xff]
    %v477 = vld [vmem:[#allocation5 + $0xc18] sm:$0xff]
    %v478 = vld [vmem:[#allocation5 + $0xc20] sm:$0xff]
    %v479 = vld [vmem:[#allocation5 + $0xc28] sm:$0xff]
    %v480 = vld [vmem:[#allocation5 + $0xc30] sm:$0xff]
    %v481 = vld [vmem:[#allocation5 + $0xc38] sm:$0xff]
    %v482 = vld [vmem:[#allocation5 + $0xc40] sm:$0xff]
    %v483 = vld [vmem:[#allocation5 + $0xc48] sm:$0xff]
    %v484 = vld [vmem:[#allocation5 + $0xc50] sm:$0xff]
    %v485 = vld [vmem:[#allocation5 + $0xc58] sm:$0xff]
    %v486 = vld [vmem:[#allocation5 + $0xc60] sm:$0xff]
    %v487 = vld [vmem:[#allocation5 + $0xc68] sm:$0xff]
    %v488 = vld [vmem:[#allocation5 + $0xc70] sm:$0xff]
    %v489 = vld [vmem:[#allocation5 + $0xc78] sm:$0xff]
    %v490 = vld [vmem:[#allocation5 + $0xc80] sm:$0xff]
    %v491 = vld [vmem:[#allocation5 + $0xc88] sm:$0xff]
    %v492 = vld [vmem:[#allocation5 + $0xc90] sm:$0xff]
    %v493 = vld [vmem:[#allocation5 + $0xc98] sm:$0xff]
    %v494 = vld [vmem:[#allocation5 + $0xca0] sm:$0xff]
    %v495 = vld [vmem:[#allocation5 + $0xca8] sm:$0xff]
    %v496 = vld [vmem:[#allocation5 + $0xcb0] sm:$0xff]
    %v497 = vld [vmem:[#allocation5 + $0xcb8] sm:$0xff]
    %v498 = vld [vmem:[#allocation5 + $0xcc0] sm:$0xff]
    %v499 = vld [vmem:[#allocation5 + $0xcc8] sm:$0xff]
    %v500 = vld [vmem:[#allocation5 + $0xcd0] sm:$0xff]
    %v501 = vld [vmem:[#allocation5 + $0xcd8] sm:$0xff]
    %v502 = vld [vmem:[#allocation5 + $0xce0] sm:$0xff]
    %v503 = vld [vmem:[#allocation5 + $0xce8] sm:$0xff]
    %v504 = vld [vmem:[#allocation5 + $0xcf0] sm:$0xff]
    %v505 = vld [vmem:[#allocation5 + $0xcf8] sm:$0xff]
    %v506 = vld [vmem:[#allocation5 + $0xd00] sm:$0xff]
    %v507 = vld [vmem:[#allocation5 + $0xd08] sm:$0xff]
    %v508 = vld [vmem:[#allocation5 + $0xd10] sm:$0xff]
    %v509 = vld [vmem:[#allocation5 + $0xd18] sm:$0xff]
    %v510 = vld [vmem:[#allocation5 + $0xd20] sm:$0xff]
    %v511 = vld [vmem:[#allocation5 + $0xd28] sm:$0xff]
    %v512 = vld [vmem:[#allocation5 + $0xd30] sm:$0xff]
    %v513 = vld [vmem:[#allocation5 + $0xd38] sm:$0xff]
    %v514 = vld [vmem:[#allocation5 + $0xd40] sm:$0xff]
    %v515 = vld [vmem:[#allocation5 + $0xd48] sm:$0xff]
    %v516 = vld [vmem:[#allocation5 + $0xd50] sm:$0xff]
    %v517 = vld [vmem:[#allocation5 + $0xd58] sm:$0xff]
    %v518 = vld [vmem:[#allocation5 + $0xd60] sm:$0xff]
    %v519 = vld [vmem:[#allocation5 + $0xd68] sm:$0xff]
    %v520 = vld [vmem:[#allocation5 + $0xd70] sm:$0xff]
    %v521 = vld [vmem:[#allocation5 + $0xd78] sm:$0xff]
    %v522 = vld [vmem:[#allocation5 + $0xd80] sm:$0xff]
    %v523 = vld [vmem:[#allocation5 + $0xd88] sm:$0xff]
    %v524 = vld [vmem:[#allocation5 + $0xd90] sm:$0xff]
    %v525 = vld [vmem:[#allocation5 + $0xd98] sm:$0xff]
    %v526 = vld [vmem:[#allocation5 + $0xda0] sm:$0xff]
    %v527 = vld [vmem:[#allocation5 + $0xda8] sm:$0xff]
    %v528 = vld [vmem:[#allocation5 + $0xdb0] sm:$0xff]
    %v529 = vld [vmem:[#allocation5 + $0xdb8] sm:$0xff]
    %v530 = vld [vmem:[#allocation5 + $0xdc0] sm:$0xff]
    %v531 = vld [vmem:[#allocation5 + $0xdc8] sm:$0xff]
    %v532 = vld [vmem:[#allocation5 + $0xdd0] sm:$0xff]
    %v533 = vld [vmem:[#allocation5 + $0xdd8] sm:$0xff]
    %v534 = vld [vmem:[#allocation5 + $0xde0] sm:$0xff]
    %v535 = vld [vmem:[#allocation5 + $0xde8] sm:$0xff]
    %v536 = vld [vmem:[#allocation5 + $0xdf0] sm:$0xff]
    %v537 = vld [vmem:[#allocation5 + $0xdf8] sm:$0xff]
    %v538 = vld [vmem:[#allocation5 + $0xe00] sm:$0xff]
    %v539 = vld [vmem:[#allocation5 + $0xe08] sm:$0xff]
    %v540 = vld [vmem:[#allocation5 + $0xe10] sm:$0xff]
    %v541 = vld [vmem:[#allocation5 + $0xe18] sm:$0xff]
    %v542 = vld [vmem:[#allocation5 + $0xe20] sm:$0xff]
    %v543 = vld [vmem:[#allocation5 + $0xe28] sm:$0xff]
    %v544 = vld [vmem:[#allocation5 + $0xe30] sm:$0xff]
    %v545 = vld [vmem:[#allocation5 + $0xe38] sm:$0xff]
    %v546 = vld [vmem:[#allocation5 + $0xe40] sm:$0xff]
    %v547 = vld [vmem:[#allocation5 + $0xe48] sm:$0xff]
    %v548 = vld [vmem:[#allocation5 + $0xe50] sm:$0xff]
    %v549 = vld [vmem:[#allocation5 + $0xe58] sm:$0xff]
    %v550 = vld [vmem:[#allocation5 + $0xe60] sm:$0xff]
    %v551 = vld [vmem:[#allocation5 + $0xe68] sm:$0xff]
    %v552 = vld [vmem:[#allocation5 + $0xe70] sm:$0xff]
    %v553 = vld [vmem:[#allocation5 + $0xe78] sm:$0xff]
    %v554 = vld [vmem:[#allocation5 + $0xe80] sm:$0xff]
    %v555 = vld [vmem:[#allocation5 + $0xe88] sm:$0xff]
    %v556 = vld [vmem:[#allocation5 + $0xe90] sm:$0xff]
    %v557 = vld [vmem:[#allocation5 + $0xe98] sm:$0xff]
    %v558 = vld [vmem:[#allocation5 + $0xea0] sm:$0xff]
    %v559 = vld [vmem:[#allocation5 + $0xea8] sm:$0xff]
    %v560 = vld [vmem:[#allocation5 + $0xeb0] sm:$0xff]
    %v561 = vld [vmem:[#allocation5 + $0xeb8] sm:$0xff]
    %v562 = vld [vmem:[#allocation5 + $0xec0] sm:$0xff]
    %v563 = vld [vmem:[#allocation5 + $0xec8] sm:$0xff]
    %v564 = vld [vmem:[#allocation5 + $0xed0] sm:$0xff]
    %v565 = vld [vmem:[#allocation5 + $0xed8] sm:$0xff]
    %v566 = vld [vmem:[#allocation5 + $0xee0] sm:$0xff]
    %v567 = vld [vmem:[#allocation5 + $0xee8] sm:$0xff]
    %v568 = vld [vmem:[#allocation5 + $0xef0] sm:$0xff]
    %v569 = vld [vmem:[#allocation5 + $0xef8] sm:$0xff]
    %v570 = vld [vmem:[#allocation5 + $0xf00] sm:$0xff]
    %v571 = vld [vmem:[#allocation5 + $0xf08] sm:$0xff]
    %v572 = vld [vmem:[#allocation5 + $0xf10] sm:$0xff]
    %v573 = vld [vmem:[#allocation5 + $0xf18] sm:$0xff]
    %v574 = vld [vmem:[#allocation5 + $0xf20] sm:$0xff]
    %v575 = vld [vmem:[#allocation5 + $0xf28] sm:$0xff]
    %v576 = vld [vmem:[#allocation5 + $0xf30] sm:$0xff]
    %v577 = vld [vmem:[#allocation5 + $0xf38] sm:$0xff]
    %v578 = vld [vmem:[#allocation5 + $0xf40] sm:$0xff]
    %v579 = vld [vmem:[#allocation5 + $0xf48] sm:$0xff]
    %v580 = vld [vmem:[#allocation7] sm:$0x1f]
    %v582 = vlaneseq
    %v583 = vshrl.u32 %v582, 7
    %v584 = vsub.s32 0, %v583
    %v585 = vrot.slane %v580, %v584
    %v586 = vlaneseq
    %v587 = vshrl.u32 %v586, 7
    %v588 = vsub.s32 1, %v587
    %v589 = vrot.slane %v580, %v588
    %v590 = vlaneseq
    %v591 = vshrl.u32 %v590, 7
    %v592 = vsub.s32 2, %v591
    %v593 = vrot.slane %v580, %v592
    %v594 = vlaneseq
    %v595 = vshrl.u32 %v594, 7
    %v596 = vsub.s32 3, %v595
    %v597 = vrot.slane %v580, %v596
    %v598 = vlaneseq
    %v599 = vshrl.u32 %v598, 7
    %v600 = vsub.s32 4, %v599
    %v601 = vrot.slane %v580, %v600
    %vm607 = vcmask 130048
    %v609 = vsel %vm607, %v89, 0
    %611 = vmatprep.subr.mxu0 %v91
    %612 = vmatpush1.msra.mxu0 %v90
    %613 = vmatprep.subr.mxu0 %v96
    %614 = vmatpush1.msra.mxu0 %v95
    %615 = vmatprep.subr.mxu0 %v101
    %616 = vmatpush1.msra.mxu0 %v100
    %617 = vmatprep.subr.mxu0 %v106
    %618 = vmatpush1.msra.mxu0 %v105
    %619 = vmatprep.subr.mxu0 %v111
    %620 = vmatpush1.msra.mxu0 %v110
    %621 = vmatprep.subr.mxu0 %v116
    %622 = vmatpush1.msra.mxu0 %v115
    %623 = vmatprep.subr.mxu0 %v121
    %624 = vmatpush1.msra.mxu0 %v120
    %625 = vmatprep.subr.mxu0 %v126
    %626 = vmatpush1.msra.mxu0 %v125
    %627 = vmatprep.subr.mxu0 %v131
    %628 = vmatpush1.msra.mxu0 %v130
    %629 = vmatprep.subr.mxu0 %v136
    %630 = vmatpush1.msra.mxu0 %v135
    %631 = vmatprep.subr.mxu0 %v141
    %632 = vmatpush1.msra.mxu0 %v140
    %633 = vmatprep.subr.mxu0 %v146
    %634 = vmatpush1.msra.mxu0 %v145
    %635 = vmatprep.subr.mxu0 %v151
    %636 = vmatpush1.msra.mxu0 %v150
    %637 = vmatprep.subr.mxu0 %v156
    %638 = vmatpush1.msra.mxu0 %v155
    %639 = vmatprep.subr.mxu0 %v161
    %640 = vmatpush1.msra.mxu0 %v160
    %641 = vmatprep.subr.mxu0 %v166
    %642 = vmatpush1.msra.mxu0 %v165
    %643 = vmatprep.subr.mxu0 %v171
    %644 = vmatpush1.msra.mxu0 %v170
    %645 = vmatprep.subr.mxu0 %v176
    %646 = vmatpush1.msra.mxu0 %v175
    %647 = vmatprep.subr.mxu0 %v181
    %648 = vmatpush1.msra.mxu0 %v180
    %649 = vmatprep.subr.mxu0 %v186
    %650 = vmatpush1.msra.mxu0 %v185
    %651 = vmatprep.subr.mxu0 %v191
    %652 = vmatpush1.msra.mxu0 %v190
    %653 = vmatprep.subr.mxu0 %v196
    %654 = vmatpush1.msra.mxu0 %v195
    %655 = vmatprep.subr.mxu0 %v201
    %656 = vmatpush1.msra.mxu0 %v200
    %657 = vmatprep.subr.mxu0 %v206
    %658 = vmatpush1.msra.mxu0 %v205
    %659 = vmatprep.subr.mxu0 %v211
    %660 = vmatpush1.msra.mxu0 %v210
    %661 = vmatprep.subr.mxu0 %v216
    %662 = vmatpush1.msra.mxu0 %v215
    %663 = vmatprep.subr.mxu0 %v221
    %664 = vmatpush1.msra.mxu0 %v220
    %665 = vmatprep.subr.mxu0 %v226
    %666 = vmatpush1.msra.mxu0 %v225
    %667 = vmatprep.subr.mxu0 %v231
    %668 = vmatpush1.msra.mxu0 %v230
    %669 = vmatprep.subr.mxu0 %v236
    %670 = vmatpush1.msra.mxu0 %v235
    %671 = vmatprep.subr.mxu0 %v241
    %672 = vmatpush1.msra.mxu0 %v240
    %673 = vmatprep.subr.mxu0 %v246
    %674 = vmatpush1.msra.mxu0 %v245
    %675 = vmatprep.mubr.f32.mxu0 %v84
    %676 = vmatmul.mubr.f32.gmra.mrb[0].mxu0 %v83
    %v677 = vpop.f32.mrb[0].mxu0
    %v678 = vadd.f32 %v585, %v677
    %v679 = vpop.f32.mrb[0].mxu0
    %v680 = vadd.f32 %v589, %v679
    %681 = vdwg.mxu0
    %682 = vmatprep.subr.mxu0 %v251
    %683 = vmatpush1.msra.mxu0 %v250
    %684 = vmatprep.subr.mxu0 %v256
    %685 = vmatpush1.msra.mxu0 %v255
    %686 = vmatprep.subr.mxu0 %v261
    %687 = vmatpush1.msra.mxu0 %v260
    %688 = vmatprep.subr.mxu0 %v266
    %689 = vmatpush1.msra.mxu0 %v265
    %690 = vmatprep.subr.mxu0 %v271
    %691 = vmatpush1.msra.mxu0 %v270
    %692 = vmatprep.subr.mxu0 %v276
    %693 = vmatpush1.msra.mxu0 %v275
    %694 = vmatprep.subr.mxu0 %v281
    %695 = vmatpush1.msra.mxu0 %v280
    %696 = vmatprep.subr.mxu0 %v286
    %697 = vmatpush1.msra.mxu0 %v285
    %698 = vmatprep.subr.mxu0 %v291
    %699 = vmatpush1.msra.mxu0 %v290
    %700 = vmatprep.subr.mxu0 %v296
    %701 = vmatpush1.msra.mxu0 %v295
    %702 = vmatprep.subr.mxu0 %v301
    %703 = vmatpush1.msra.mxu0 %v300
    %704 = vmatprep.subr.mxu0 %v306
    %705 = vmatpush1.msra.mxu0 %v305
    %706 = vmatprep.subr.mxu0 %v311
    %707 = vmatpush1.msra.mxu0 %v310
    %708 = vmatprep.subr.mxu0 %v316
    %709 = vmatpush1.msra.mxu0 %v315
    %710 = vmatprep.subr.mxu0 %v321
    %711 = vmatpush1.msra.mxu0 %v320
    %712 = vmatprep.subr.mxu0 %v326
    %713 = vmatpush1.msra.mxu0 %v325
    %714 = vmatprep.subr.mxu0 %v331
    %715 = vmatpush1.msra.mxu0 %v330
    %716 = vmatprep.subr.mxu0 %v336
    %717 = vmatpush1.msra.mxu0 %v335
    %718 = vmatprep.subr.mxu0 %v341
    %719 = vmatpush1.msra.mxu0 %v340
    %720 = vmatprep.subr.mxu0 %v346
    %721 = vmatpush1.msra.mxu0 %v345
    %722 = vmatprep.subr.mxu0 %v351
    %723 = vmatpush1.msra.mxu0 %v350
    %724 = vmatprep.subr.mxu0 %v356
    %725 = vmatpush1.msra.mxu0 %v355
    %726 = vmatprep.subr.mxu0 %v361
    %727 = vmatpush1.msra.mxu0 %v360
    %728 = vmatprep.subr.mxu0 %v366
    %729 = vmatpush1.msra.mxu0 %v365
    %730 = vmatprep.subr.mxu0 %v371
    %731 = vmatpush1.msra.mxu0 %v370
    %732 = vmatprep.subr.mxu0 %v376
    %733 = vmatpush1.msra.mxu0 %v375
    %734 = vmatprep.subr.mxu0 %v381
    %735 = vmatpush1.msra.mxu0 %v380
    %736 = vmatprep.subr.mxu0 %v386
    %737 = vmatpush1.msra.mxu0 %v385
    %738 = vmatprep.subr.mxu0 %v391
    %739 = vmatpush1.msra.mxu0 %v390
    %740 = vmatprep.subr.mxu0 %v396
    %741 = vmatpush1.msra.mxu0 %v395
    %742 = vmatprep.subr.mxu0 %v401
    %743 = vmatpush1.msra.mxu0 %v400
    %744 = vmatprep.subr.mxu0 %v406
    %745 = vmatpush1.msra.mxu0 %v405
    %746 = vmatprep.mubr.f32.mxu0 %v86
    %747 = vmatmul.mubr.f32.gmra.mrb[0].mxu0 %v85
    %v748 = vpop.f32.mrb[0].mxu0
    %v749 = vadd.f32 %v678, %v748
    %v750 = vpop.f32.mrb[0].mxu0
    %v751 = vadd.f32 %v680, %v750
    %752 = vdwg.mxu0
    %753 = vmatprep.subr.mxu0 %v411
    %754 = vmatpush1.msra.mxu0 %v410
    %755 = vmatprep.subr.mxu0 %v416
    %756 = vmatpush1.msra.mxu0 %v415
    %757 = vmatprep.subr.mxu0 %v421
    %758 = vmatpush1.msra.mxu0 %v420
    %759 = vmatprep.subr.mxu0 %v426
    %760 = vmatpush1.msra.mxu0 %v425
    %761 = vmatprep.subr.mxu0 %v431
    %762 = vmatpush1.msra.mxu0 %v430
    %763 = vmatprep.subr.mxu0 %v436
    %764 = vmatpush1.msra.mxu0 %v435
    %765 = vmatprep.subr.mxu0 %v441
    %766 = vmatpush1.msra.mxu0 %v440
    %767 = vmatprep.subr.mxu0 %v446
    %768 = vmatpush1.msra.mxu0 %v445
    %769 = vmatprep.subr.mxu0 %v451
    %770 = vmatpush1.msra.mxu0 %v450
    %771 = vmatprep.subr.mxu0 %v456
    %772 = vmatpush1.msra.mxu0 %v455
    %773 = vmatprep.subr.mxu0 %v461
    %774 = vmatpush1.msra.mxu0 %v460
    %775 = vmatprep.subr.mxu0 %v466
    %776 = vmatpush1.msra.mxu0 %v465
    %777 = vmatprep.subr.mxu0 %v471
    %778 = vmatpush1.msra.mxu0 %v470
    %779 = vmatprep.subr.mxu0 %v476
    %780 = vmatpush1.msra.mxu0 %v475
    %781 = vmatprep.subr.mxu0 %v481
    %782 = vmatpush1.msra.mxu0 %v480
    %783 = vmatprep.subr.mxu0 %v486
    %784 = vmatpush1.msra.mxu0 %v485
    %785 = vmatprep.subr.mxu0 %v491
    %786 = vmatpush1.msra.mxu0 %v490
    %787 = vmatprep.subr.mxu0 %v496
    %788 = vmatpush1.msra.mxu0 %v495
    %789 = vmatprep.subr.mxu0 %v501
    %790 = vmatpush1.msra.mxu0 %v500
    %791 = vmatprep.subr.mxu0 %v506
    %792 = vmatpush1.msra.mxu0 %v505
    %793 = vmatprep.subr.mxu0 %v511
    %794 = vmatpush1.msra.mxu0 %v510
    %795 = vmatprep.subr.mxu0 %v516
    %796 = vmatpush1.msra.mxu0 %v515
    %797 = vmatprep.subr.mxu0 %v521
    %798 = vmatpush1.msra.mxu0 %v520
    %799 = vmatprep.subr.mxu0 %v526
    %800 = vmatpush1.msra.mxu0 %v525
    %801 = vmatprep.subr.mxu0 %v531
    %802 = vmatpush1.msra.mxu0 %v530
    %803 = vmatprep.subr.mxu0 %v536
    %804 = vmatpush1.msra.mxu0 %v535
    %805 = vmatprep.subr.mxu0 %v541
    %806 = vmatpush1.msra.mxu0 %v540
    %807 = vmatprep.subr.mxu0 %v546
    %808 = vmatpush1.msra.mxu0 %v545
    %809 = vmatprep.subr.mxu0 %v551
    %810 = vmatpush1.msra.mxu0 %v550
    %811 = vmatprep.subr.mxu0 %v556
    %812 = vmatpush1.msra.mxu0 %v555
    %813 = vmatprep.subr.mxu0 %v561
    %814 = vmatpush1.msra.mxu0 %v560
    %815 = vmatprep.subr.mxu0 %v566
    %816 = vmatpush1.msra.mxu0 %v565
    %817 = vmatprep.mubr.f32.mxu0 %v88
    %818 = vmatmul.mubr.f32.gmra.mrb[0].mxu0 %v87
    %v819 = vpop.f32.mrb[0].mxu0
    %v820 = vadd.f32 %v749, %v819
    %v821 = vpop.f32.mrb[0].mxu0
    %v822 = vadd.f32 %v751, %v821
    %823 = vdwg.mxu0
    %824 = vmatprep.subr.mxu0 %v571
    %825 = vmatpush1.msra.mxu0 %v570
    %826 = vmatprep.subr.mxu0 %v576
    %827 = vmatpush1.msra.mxu0 %v575
    %828 = vmatprep.subr.mxu0 0.0
    %829 = vmatpush1.msra.mxu0 0.0
    %830 = vmatprep.subr.mxu0 0.0
    %831 = vmatpush1.msra.mxu0 0.0
    %832 = vmatprep.subr.mxu0 0.0
    %833 = vmatpush1.msra.mxu0 0.0
    %834 = vmatprep.subr.mxu0 0.0
    %835 = vmatpush1.msra.mxu0 0.0
    %836 = vmatprep.subr.mxu0 0.0
    %837 = vmatpush1.msra.mxu0 0.0
    %838 = vmatprep.subr.mxu0 0.0
    %839 = vmatpush1.msra.mxu0 0.0
    %840 = vmatprep.subr.mxu0 0.0
    %841 = vmatpush1.msra.mxu0 0.0
    %842 = vmatprep.subr.mxu0 0.0
    %843 = vmatpush1.msra.mxu0 0.0
    %844 = vmatprep.subr.mxu0 0.0
    %845 = vmatpush1.msra.mxu0 0.0
    %846 = vmatprep.subr.mxu0 0.0
    %847 = vmatpush1.msra.mxu0 0.0
    %848 = vmatprep.subr.mxu0 0.0
    %849 = vmatpush1.msra.mxu0 0.0
    %850 = vmatprep.subr.mxu0 0.0
    %851 = vmatpush1.msra.mxu0 0.0
    %852 = vmatprep.subr.mxu0 0.0
    %853 = vmatpush1.msra.mxu0 0.0
    %854 = vmatprep.subr.mxu0 0.0
    %855 = vmatpush1.msra.mxu0 0.0
    %856 = vmatprep.subr.mxu0 0.0
    %857 = vmatpush1.msra.mxu0 0.0
    %858 = vmatprep.subr.mxu0 0.0
    %859 = vmatpush1.msra.mxu0 0.0
    %860 = vmatprep.subr.mxu0 0.0
    %861 = vmatpush1.msra.mxu0 0.0
    %862 = vmatprep.subr.mxu0 0.0
    %863 = vmatpush1.msra.mxu0 0.0
    %864 = vmatprep.subr.mxu0 0.0
    %865 = vmatpush1.msra.mxu0 0.0
    %866 = vmatprep.subr.mxu0 0.0
    %867 = vmatpush1.msra.mxu0 0.0
    %868 = vmatprep.subr.mxu0 0.0
    %869 = vmatpush1.msra.mxu0 0.0
    %870 = vmatprep.subr.mxu0 0.0
    %871 = vmatpush1.msra.mxu0 0.0
    %872 = vmatprep.subr.mxu0 0.0
    %873 = vmatpush1.msra.mxu0 0.0
    %874 = vmatprep.subr.mxu0 0.0
    %875 = vmatpush1.msra.mxu0 0.0
    %876 = vmatprep.subr.mxu0 0.0
    %877 = vmatpush1.msra.mxu0 0.0
    %878 = vmatprep.subr.mxu0 0.0
    %879 = vmatpush1.msra.mxu0 0.0
    %880 = vmatprep.subr.mxu0 0.0
    %881 = vmatpush1.msra.mxu0 0.0
    %882 = vmatprep.subr.mxu0 0.0
    %883 = vmatpush1.msra.mxu0 0.0
    %884 = vmatprep.subr.mxu0 0.0
    %885 = vmatpush1.msra.mxu0 0.0
    %886 = vmatprep.subr.mxu0 0.0
    %887 = vmatpush1.msra.mxu0 0.0
    %888 = vmatprep.mubr.f32.mxu0 0.0
    %889 = vmatmul.mubr.f32.gmra.mrb[0].mxu0 %v609
    %v890 = vpop.f32.mrb[0].mxu0
    %v891 = vadd.f32 %v820, %v890
    %v892 = vpop.f32.mrb[0].mxu0
    %v893 = vadd.f32 %v822, %v892
    %894 = vdwg.mxu0
    %895 = vmatprep.subr.mxu0 %v93
    %896 = vmatpush1.msra.mxu0 %v92
    %897 = vmatprep.subr.mxu0 %v98
    %898 = vmatpush1.msra.mxu0 %v97
    %899 = vmatprep.subr.mxu0 %v103
    %900 = vmatpush1.msra.mxu0 %v102
    %901 = vmatprep.subr.mxu0 %v108
    %902 = vmatpush1.msra.mxu0 %v107
    %903 = vmatprep.subr.mxu0 %v113
    %904 = vmatpush1.msra.mxu0 %v112
    %905 = vmatprep.subr.mxu0 %v118
    %906 = vmatpush1.msra.mxu0 %v117
    %907 = vmatprep.subr.mxu0 %v123
    %908 = vmatpush1.msra.mxu0 %v122
    %909 = vmatprep.subr.mxu0 %v128
    %910 = vmatpush1.msra.mxu0 %v127
    %911 = vmatprep.subr.mxu0 %v133
    %912 = vmatpush1.msra.mxu0 %v132
    %913 = vmatprep.subr.mxu0 %v138
    %914 = vmatpush1.msra.mxu0 %v137
    %915 = vmatprep.subr.mxu0 %v143
    %916 = vmatpush1.msra.mxu0 %v142
    %917 = vmatprep.subr.mxu0 %v148
    %918 = vmatpush1.msra.mxu0 %v147
    %919 = vmatprep.subr.mxu0 %v153
    %920 = vmatpush1.msra.mxu0 %v152
    %921 = vmatprep.subr.mxu0 %v158
    %922 = vmatpush1.msra.mxu0 %v157
    %923 = vmatprep.subr.mxu0 %v163
    %924 = vmatpush1.msra.mxu0 %v162
    %925 = vmatprep.subr.mxu0 %v168
    %926 = vmatpush1.msra.mxu0 %v167
    %927 = vmatprep.subr.mxu0 %v173
    %928 = vmatpush1.msra.mxu0 %v172
    %929 = vmatprep.subr.mxu0 %v178
    %930 = vmatpush1.msra.mxu0 %v177
    %931 = vmatprep.subr.mxu0 %v183
    %932 = vmatpush1.msra.mxu0 %v182
    %933 = vmatprep.subr.mxu0 %v188
    %934 = vmatpush1.msra.mxu0 %v187
    %935 = vmatprep.subr.mxu0 %v193
    %936 = vmatpush1.msra.mxu0 %v192
    %937 = vmatprep.subr.mxu0 %v198
    %938 = vmatpush1.msra.mxu0 %v197
    %939 = vmatprep.subr.mxu0 %v203
    %940 = vmatpush1.msra.mxu0 %v202
    %941 = vmatprep.subr.mxu0 %v208
    %942 = vmatpush1.msra.mxu0 %v207
    %943 = vmatprep.subr.mxu0 %v213
    %944 = vmatpush1.msra.mxu0 %v212
    %945 = vmatprep.subr.mxu0 %v218
    %946 = vmatpush1.msra.mxu0 %v217
    %947 = vmatprep.subr.mxu0 %v223
    %948 = vmatpush1.msra.mxu0 %v222
    %949 = vmatprep.subr.mxu0 %v228
    %950 = vmatpush1.msra.mxu0 %v227
    %951 = vmatprep.subr.mxu0 %v233
    %952 = vmatpush1.msra.mxu0 %v232
    %953 = vmatprep.subr.mxu0 %v238
    %954 = vmatpush1.msra.mxu0 %v237
    %955 = vmatprep.subr.mxu0 %v243
    %956 = vmatpush1.msra.mxu0 %v242
    %957 = vmatprep.subr.mxu0 %v248
    %958 = vmatpush1.msra.mxu0 %v247
    %959 = vmatprep.mubr.f32.mxu0 %v84
    %960 = vmatmul.mubr.f32.gmra.mrb[0].mxu0 %v83
    %v961 = vpop.f32.mrb[0].mxu0
    %v962 = vadd.f32 %v593, %v961
    %v963 = vpop.f32.mrb[0].mxu0
    %v964 = vadd.f32 %v597, %v963
    %965 = vdwg.mxu0
    %966 = vmatprep.subr.mxu0 %v253
    %967 = vmatpush1.msra.mxu0 %v252
    %968 = vmatprep.subr.mxu0 %v258
    %969 = vmatpush1.msra.mxu0 %v257
    %970 = vmatprep.subr.mxu0 %v263
    %971 = vmatpush1.msra.mxu0 %v262
    %972 = vmatprep.subr.mxu0 %v268
    %973 = vmatpush1.msra.mxu0 %v267
    %974 = vmatprep.subr.mxu0 %v273
    %975 = vmatpush1.msra.mxu0 %v272
    %976 = vmatprep.subr.mxu0 %v278
    %977 = vmatpush1.msra.mxu0 %v277
    %978 = vmatprep.subr.mxu0 %v283
    %979 = vmatpush1.msra.mxu0 %v282
    %980 = vmatprep.subr.mxu0 %v288
    %981 = vmatpush1.msra.mxu0 %v287
    %982 = vmatprep.subr.mxu0 %v293
    %983 = vmatpush1.msra.mxu0 %v292
    %984 = vmatprep.subr.mxu0 %v298
    %985 = vmatpush1.msra.mxu0 %v297
    %986 = vmatprep.subr.mxu0 %v303
    %987 = vmatpush1.msra.mxu0 %v302
    %988 = vmatprep.subr.mxu0 %v308
    %989 = vmatpush1.msra.mxu0 %v307
    %990 = vmatprep.subr.mxu0 %v313
    %991 = vmatpush1.msra.mxu0 %v312
    %992 = vmatprep.subr.mxu0 %v318
    %993 = vmatpush1.msra.mxu0 %v317
    %994 = vmatprep.subr.mxu0 %v323
    %995 = vmatpush1.msra.mxu0 %v322
    %996 = vmatprep.subr.mxu0 %v328
    %997 = vmatpush1.msra.mxu0 %v327
    %998 = vmatprep.subr.mxu0 %v333
    %999 = vmatpush1.msra.mxu0 %v332
    %1000 = vmatprep.subr.mxu0 %v338
    %1001 = vmatpush1.msra.mxu0 %v337
    %1002 = vmatprep.subr.mxu0 %v343
    %1003 = vmatpush1.msra.mxu0 %v342
    %1004 = vmatprep.subr.mxu0 %v348
    %1005 = vmatpush1.msra.mxu0 %v347
    %1006 = vmatprep.subr.mxu0 %v353
    %1007 = vmatpush1.msra.mxu0 %v352
    %1008 = vmatprep.subr.mxu0 %v358
    %1009 = vmatpush1.msra.mxu0 %v357
    %1010 = vmatprep.subr.mxu0 %v363
    %1011 = vmatpush1.msra.mxu0 %v362
    %1012 = vmatprep.subr.mxu0 %v368
    %1013 = vmatpush1.msra.mxu0 %v367
    %1014 = vmatprep.subr.mxu0 %v373
    %1015 = vmatpush1.msra.mxu0 %v372
    %1016 = vmatprep.subr.mxu0 %v378
    %1017 = vmatpush1.msra.mxu0 %v377
    %1018 = vmatprep.subr.mxu0 %v383
    %1019 = vmatpush1.msra.mxu0 %v382
    %1020 = vmatprep.subr.mxu0 %v388
    %1021 = vmatpush1.msra.mxu0 %v387
    %1022 = vmatprep.subr.mxu0 %v393
    %1023 = vmatpush1.msra.mxu0 %v392
    %1024 = vmatprep.subr.mxu0 %v398
    %1025 = vmatpush1.msra.mxu0 %v397
    %1026 = vmatprep.subr.mxu0 %v403
    %1027 = vmatpush1.msra.mxu0 %v402
    %1028 = vmatprep.subr.mxu0 %v408
    %1029 = vmatpush1.msra.mxu0 %v407
    %1030 = vmatprep.mubr.f32.mxu0 %v86
    %1031 = vmatmul.mubr.f32.gmra.mrb[0].mxu0 %v85
    %v1032 = vpop.f32.mrb[0].mxu0
    %v1033 = vadd.f32 %v962, %v1032
    %v1034 = vpop.f32.mrb[0].mxu0
    %v1035 = vadd.f32 %v964, %v1034
    %1036 = vdwg.mxu0
    %1037 = vmatprep.subr.mxu0 %v413
    %1038 = vmatpush1.msra.mxu0 %v412
    %1039 = vmatprep.subr.mxu0 %v418
    %1040 = vmatpush1.msra.mxu0 %v417
    %1041 = vmatprep.subr.mxu0 %v423
    %1042 = vmatpush1.msra.mxu0 %v422
    %1043 = vmatprep.subr.mxu0 %v428
    %1044 = vmatpush1.msra.mxu0 %v427
    %1045 = vmatprep.subr.mxu0 %v433
    %1046 = vmatpush1.msra.mxu0 %v432
    %1047 = vmatprep.subr.mxu0 %v438
    %1048 = vmatpush1.msra.mxu0 %v437
    %1049 = vmatprep.subr.mxu0 %v443
    %1050 = vmatpush1.msra.mxu0 %v442
    %1051 = vmatprep.subr.mxu0 %v448
    %1052 = vmatpush1.msra.mxu0 %v447
    %1053 = vmatprep.subr.mxu0 %v453
    %1054 = vmatpush1.msra.mxu0 %v452
    %1055 = vmatprep.subr.mxu0 %v458
    %1056 = vmatpush1.msra.mxu0 %v457
    %1057 = vmatprep.subr.mxu0 %v463
    %1058 = vmatpush1.msra.mxu0 %v462
    %1059 = vmatprep.subr.mxu0 %v468
    %1060 = vmatpush1.msra.mxu0 %v467
    %1061 = vmatprep.subr.mxu0 %v473
    %1062 = vmatpush1.msra.mxu0 %v472
    %1063 = vmatprep.subr.mxu0 %v478
    %1064 = vmatpush1.msra.mxu0 %v477
    %1065 = vmatprep.subr.mxu0 %v483
    %1066 = vmatpush1.msra.mxu0 %v482
    %1067 = vmatprep.subr.mxu0 %v488
    %1068 = vmatpush1.msra.mxu0 %v487
    %1069 = vmatprep.subr.mxu0 %v493
    %1070 = vmatpush1.msra.mxu0 %v492
    %1071 = vmatprep.subr.mxu0 %v498
    %1072 = vmatpush1.msra.mxu0 %v497
    %1073 = vmatprep.subr.mxu0 %v503
    %1074 = vmatpush1.msra.mxu0 %v502
    %1075 = vmatprep.subr.mxu0 %v508
    %1076 = vmatpush1.msra.mxu0 %v507
    %1077 = vmatprep.subr.mxu0 %v513
    %1078 = vmatpush1.msra.mxu0 %v512
    %1079 = vmatprep.subr.mxu0 %v518
    %1080 = vmatpush1.msra.mxu0 %v517
    %1081 = vmatprep.subr.mxu0 %v523
    %1082 = vmatpush1.msra.mxu0 %v522
    %1083 = vmatprep.subr.mxu0 %v528
    %1084 = vmatpush1.msra.mxu0 %v527
    %1085 = vmatprep.subr.mxu0 %v533
    %1086 = vmatpush1.msra.mxu0 %v532
    %1087 = vmatprep.subr.mxu0 %v538
    %1088 = vmatpush1.msra.mxu0 %v537
    %1089 = vmatprep.subr.mxu0 %v543
    %1090 = vmatpush1.msra.mxu0 %v542
    %1091 = vmatprep.subr.mxu0 %v548
    %1092 = vmatpush1.msra.mxu0 %v547
    %1093 = vmatprep.subr.mxu0 %v553
    %1094 = vmatpush1.msra.mxu0 %v552
    %1095 = vmatprep.subr.mxu0 %v558
    %1096 = vmatpush1.msra.mxu0 %v557
    %1097 = vmatprep.subr.mxu0 %v563
    %1098 = vmatpush1.msra.mxu0 %v562
    %1099 = vmatprep.subr.mxu0 %v568
    %1100 = vmatpush1.msra.mxu0 %v567
    %1101 = vmatprep.mubr.f32.mxu0 %v88
    %1102 = vmatmul.mubr.f32.gmra.mrb[0].mxu0 %v87
    %v1103 = vpop.f32.mrb[0].mxu0
    %v1104 = vadd.f32 %v1033, %v1103
    %v1105 = vpop.f32.mrb[0].mxu0
    %v1106 = vadd.f32 %v1035, %v1105
    %1107 = vdwg.mxu0
    %1108 = vmatprep.subr.mxu0 %v573
    %1109 = vmatpush1.msra.mxu0 %v572
    %1110 = vmatprep.subr.mxu0 %v578
    %1111 = vmatpush1.msra.mxu0 %v577
    %1112 = vmatprep.subr.mxu0 0.0
    %1113 = vmatpush1.msra.mxu0 0.0
    %1114 = vmatprep.subr.mxu0 0.0
    %1115 = vmatpush1.msra.mxu0 0.0
    %1116 = vmatprep.subr.mxu0 0.0
    %1117 = vmatpush1.msra.mxu0 0.0
    %1118 = vmatprep.subr.mxu0 0.0
    %1119 = vmatpush1.msra.mxu0 0.0
    %1120 = vmatprep.subr.mxu0 0.0
    %1121 = vmatpush1.msra.mxu0 0.0
    %1122 = vmatprep.subr.mxu0 0.0
    %1123 = vmatpush1.msra.mxu0 0.0
    %1124 = vmatprep.subr.mxu0 0.0
    %1125 = vmatpush1.msra.mxu0 0.0
    %1126 = vmatprep.subr.mxu0 0.0
    %1127 = vmatpush1.msra.mxu0 0.0
    %1128 = vmatprep.subr.mxu0 0.0
    %1129 = vmatpush1.msra.mxu0 0.0
    %1130 = vmatprep.subr.mxu0 0.0
    %1131 = vmatpush1.msra.mxu0 0.0
    %1132 = vmatprep.subr.mxu0 0.0
    %1133 = vmatpush1.msra.mxu0 0.0
    %1134 = vmatprep.subr.mxu0 0.0
    %1135 = vmatpush1.msra.mxu0 0.0
    %1136 = vmatprep.subr.mxu0 0.0
    %1137 = vmatpush1.msra.mxu0 0.0
    %1138 = vmatprep.subr.mxu0 0.0
    %1139 = vmatpush1.msra.mxu0 0.0
    %1140 = vmatprep.subr.mxu0 0.0
    %1141 = vmatpush1.msra.mxu0 0.0
    %1142 = vmatprep.subr.mxu0 0.0
    %1143 = vmatpush1.msra.mxu0 0.0
    %1144 = vmatprep.subr.mxu0 0.0
    %1145 = vmatpush1.msra.mxu0 0.0
    %1146 = vmatprep.subr.mxu0 0.0
    %1147 = vmatpush1.msra.mxu0 0.0
    %1148 = vmatprep.subr.mxu0 0.0
    %1149 = vmatpush1.msra.mxu0 0.0
    %1150 = vmatprep.subr.mxu0 0.0
    %1151 = vmatpush1.msra.mxu0 0.0
    %1152 = vmatprep.subr.mxu0 0.0
    %1153 = vmatpush1.msra.mxu0 0.0
    %1154 = vmatprep.subr.mxu0 0.0
    %1155 = vmatpush1.msra.mxu0 0.0
    %1156 = vmatprep.subr.mxu0 0.0
    %1157 = vmatpush1.msra.mxu0 0.0
    %1158 = vmatprep.subr.mxu0 0.0
    %1159 = vmatpush1.msra.mxu0 0.0
    %1160 = vmatprep.subr.mxu0 0.0
    %1161 = vmatpush1.msra.mxu0 0.0
    %1162 = vmatprep.subr.mxu0 0.0
    %1163 = vmatpush1.msra.mxu0 0.0
    %1164 = vmatprep.subr.mxu0 0.0
    %1165 = vmatpush1.msra.mxu0 0.0
    %1166 = vmatprep.subr.mxu0 0.0
    %1167 = vmatpush1.msra.mxu0 0.0
    %1168 = vmatprep.subr.mxu0 0.0
    %1169 = vmatpush1.msra.mxu0 0.0
    %1170 = vmatprep.subr.mxu0 0.0
    %1171 = vmatpush1.msra.mxu0 0.0
    %1172 = vmatprep.mubr.f32.mxu0 0.0
    %1173 = vmatmul.mubr.f32.gmra.mrb[0].mxu0 %v609
    %v1174 = vpop.f32.mrb[0].mxu0
    %v1175 = vadd.f32 %v1104, %v1174
    %v1176 = vpop.f32.mrb[0].mxu0
    %v1177 = vadd.f32 %v1106, %v1176
    %1178 = vdwg.mxu0
    %1179 = vmatprep.subr.mxu0 0.0
    %1180 = vmatpush1.msra.mxu0 %v94
    %1181 = vmatprep.subr.mxu0 0.0
    %1182 = vmatpush1.msra.mxu0 %v99
    %1183 = vmatprep.subr.mxu0 0.0
    %1184 = vmatpush1.msra.mxu0 %v104
    %1185 = vmatprep.subr.mxu0 0.0
    %1186 = vmatpush1.msra.mxu0 %v109
    %1187 = vmatprep.subr.mxu0 0.0
    %1188 = vmatpush1.msra.mxu0 %v114
    %1189 = vmatprep.subr.mxu0 0.0
    %1190 = vmatpush1.msra.mxu0 %v119
    %1191 = vmatprep.subr.mxu0 0.0
    %1192 = vmatpush1.msra.mxu0 %v124
    %1193 = vmatprep.subr.mxu0 0.0
    %1194 = vmatpush1.msra.mxu0 %v129
    %1195 = vmatprep.subr.mxu0 0.0
    %1196 = vmatpush1.msra.mxu0 %v134
    %1197 = vmatprep.subr.mxu0 0.0
    %1198 = vmatpush1.msra.mxu0 %v139
    %1199 = vmatprep.subr.mxu0 0.0
    %1200 = vmatpush1.msra.mxu0 %v144
    %1201 = vmatprep.subr.mxu0 0.0
    %1202 = vmatpush1.msra.mxu0 %v149
    %1203 = vmatprep.subr.mxu0 0.0
    %1204 = vmatpush1.msra.mxu0 %v154
    %1205 = vmatprep.subr.mxu0 0.0
    %1206 = vmatpush1.msra.mxu0 %v159
    %1207 = vmatprep.subr.mxu0 0.0
    %1208 = vmatpush1.msra.mxu0 %v164
    %1209 = vmatprep.subr.mxu0 0.0
    %1210 = vmatpush1.msra.mxu0 %v169
    %1211 = vmatprep.subr.mxu0 0.0
    %1212 = vmatpush1.msra.mxu0 %v174
    %1213 = vmatprep.subr.mxu0 0.0
    %1214 = vmatpush1.msra.mxu0 %v179
    %1215 = vmatprep.subr.mxu0 0.0
    %1216 = vmatpush1.msra.mxu0 %v184
    %1217 = vmatprep.subr.mxu0 0.0
    %1218 = vmatpush1.msra.mxu0 %v189
    %1219 = vmatprep.subr.mxu0 0.0
    %1220 = vmatpush1.msra.mxu0 %v194
    %1221 = vmatprep.subr.mxu0 0.0
    %1222 = vmatpush1.msra.mxu0 %v199
    %1223 = vmatprep.subr.mxu0 0.0
    %1224 = vmatpush1.msra.mxu0 %v204
    %1225 = vmatprep.subr.mxu0 0.0
    %1226 = vmatpush1.msra.mxu0 %v209
    %1227 = vmatprep.subr.mxu0 0.0
    %1228 = vmatpush1.msra.mxu0 %v214
    %1229 = vmatprep.subr.mxu0 0.0
    %1230 = vmatpush1.msra.mxu0 %v219
    %1231 = vmatprep.subr.mxu0 0.0
    %1232 = vmatpush1.msra.mxu0 %v224
    %1233 = vmatprep.subr.mxu0 0.0
    %1234 = vmatpush1.msra.mxu0 %v229
    %1235 = vmatprep.subr.mxu0 0.0
    %1236 = vmatpush1.msra.mxu0 %v234
    %1237 = vmatprep.subr.mxu0 0.0
    %1238 = vmatpush1.msra.mxu0 %v239
    %1239 = vmatprep.subr.mxu0 0.0
    %1240 = vmatpush1.msra.mxu0 %v244
    %1241 = vmatprep.subr.mxu0 0.0
    %1242 = vmatpush1.msra.mxu0 %v249
    %1243 = vmatprep.mubr.f32.mxu0 %v84
    %1244 = vmatmul.mubr.f32.gmra.mrb[0].mxu0 %v83
    %v1245 = vpop.f32.mrb[0].mxu0
    %v1246 = vadd.f32 %v601, %v1245
    %v1247 = vpop.f32.mrb[0].mxu0
    %1248 = vdwg.mxu0
    %1249 = vmatprep.subr.mxu0 0.0
    %1250 = vmatpush1.msra.mxu0 %v254
    %1251 = vmatprep.subr.mxu0 0.0
    %1252 = vmatpush1.msra.mxu0 %v259
    %1253 = vmatprep.subr.mxu0 0.0
    %1254 = vmatpush1.msra.mxu0 %v264
    %1255 = vmatprep.subr.mxu0 0.0
    %1256 = vmatpush1.msra.mxu0 %v269
    %1257 = vmatprep.subr.mxu0 0.0
    %1258 = vmatpush1.msra.mxu0 %v274
    %1259 = vmatprep.subr.mxu0 0.0
    %1260 = vmatpush1.msra.mxu0 %v279
    %1261 = vmatprep.subr.mxu0 0.0
    %1262 = vmatpush1.msra.mxu0 %v284
    %1263 = vmatprep.subr.mxu0 0.0
    %1264 = vmatpush1.msra.mxu0 %v289
    %1265 = vmatprep.subr.mxu0 0.0
    %1266 = vmatpush1.msra.mxu0 %v294
    %1267 = vmatprep.subr.mxu0 0.0
    %1268 = vmatpush1.msra.mxu0 %v299
    %1269 = vmatprep.subr.mxu0 0.0
    %1270 = vmatpush1.msra.mxu0 %v304
    %1271 = vmatprep.subr.mxu0 0.0
    %1272 = vmatpush1.msra.mxu0 %v309
    %1273 = vmatprep.subr.mxu0 0.0
    %1274 = vmatpush1.msra.mxu0 %v314
    %1275 = vmatprep.subr.mxu0 0.0
    %1276 = vmatpush1.msra.mxu0 %v319
    %1277 = vmatprep.subr.mxu0 0.0
    %1278 = vmatpush1.msra.mxu0 %v324
    %1279 = vmatprep.subr.mxu0 0.0
    %1280 = vmatpush1.msra.mxu0 %v329
    %1281 = vmatprep.subr.mxu0 0.0
    %1282 = vmatpush1.msra.mxu0 %v334
    %1283 = vmatprep.subr.mxu0 0.0
    %1284 = vmatpush1.msra.mxu0 %v339
    %1285 = vmatprep.subr.mxu0 0.0
    %1286 = vmatpush1.msra.mxu0 %v344
    %1287 = vmatprep.subr.mxu0 0.0
    %1288 = vmatpush1.msra.mxu0 %v349
    %1289 = vmatprep.subr.mxu0 0.0
    %1290 = vmatpush1.msra.mxu0 %v354
    %1291 = vmatprep.subr.mxu0 0.0
    %1292 = vmatpush1.msra.mxu0 %v359
    %1293 = vmatprep.subr.mxu0 0.0
    %1294 = vmatpush1.msra.mxu0 %v364
    %1295 = vmatprep.subr.mxu0 0.0
    %1296 = vmatpush1.msra.mxu0 %v369
    %1297 = vmatprep.subr.mxu0 0.0
    %1298 = vmatpush1.msra.mxu0 %v374
    %1299 = vmatprep.subr.mxu0 0.0
    %1300 = vmatpush1.msra.mxu0 %v379
    %1301 = vmatprep.subr.mxu0 0.0
    %1302 = vmatpush1.msra.mxu0 %v384
    %1303 = vmatprep.subr.mxu0 0.0
    %1304 = vmatpush1.msra.mxu0 %v389
    %1305 = vmatprep.subr.mxu0 0.0
    %1306 = vmatpush1.msra.mxu0 %v394
    %1307 = vmatprep.subr.mxu0 0.0
    %1308 = vmatpush1.msra.mxu0 %v399
    %1309 = vmatprep.subr.mxu0 0.0
    %1310 = vmatpush1.msra.mxu0 %v404
    %1311 = vmatprep.subr.mxu0 0.0
    %1312 = vmatpush1.msra.mxu0 %v409
    %1313 = vmatprep.mubr.f32.mxu0 %v86
    %1314 = vmatmul.mubr.f32.gmra.mrb[0].mxu0 %v85
    %v1315 = vpop.f32.mrb[0].mxu0
    %v1316 = vadd.f32 %v1246, %v1315
    %v1317 = vpop.f32.mrb[0].mxu0
    %1318 = vdwg.mxu0
    %1319 = vmatprep.subr.mxu0 0.0
    %1320 = vmatpush1.msra.mxu0 %v414
    %1321 = vmatprep.subr.mxu0 0.0
    %1322 = vmatpush1.msra.mxu0 %v419
    %1323 = vmatprep.subr.mxu0 0.0
    %1324 = vmatpush1.msra.mxu0 %v424
    %1325 = vmatprep.subr.mxu0 0.0
    %1326 = vmatpush1.msra.mxu0 %v429
    %1327 = vmatprep.subr.mxu0 0.0
    %1328 = vmatpush1.msra.mxu0 %v434
    %1329 = vmatprep.subr.mxu0 0.0
    %1330 = vmatpush1.msra.mxu0 %v439
    %1331 = vmatprep.subr.mxu0 0.0
    %1332 = vmatpush1.msra.mxu0 %v444
    %1333 = vmatprep.subr.mxu0 0.0
    %1334 = vmatpush1.msra.mxu0 %v449
    %1335 = vmatprep.subr.mxu0 0.0
    %1336 = vmatpush1.msra.mxu0 %v454
    %1337 = vmatprep.subr.mxu0 0.0
    %1338 = vmatpush1.msra.mxu0 %v459
    %1339 = vmatprep.subr.mxu0 0.0
    %1340 = vmatpush1.msra.mxu0 %v464
    %1341 = vmatprep.subr.mxu0 0.0
    %1342 = vmatpush1.msra.mxu0 %v469
    %1343 = vmatprep.subr.mxu0 0.0
    %1344 = vmatpush1.msra.mxu0 %v474
    %1345 = vmatprep.subr.mxu0 0.0
    %1346 = vmatpush1.msra.mxu0 %v479
    %1347 = vmatprep.subr.mxu0 0.0
    %1348 = vmatpush1.msra.mxu0 %v484
    %1349 = vmatprep.subr.mxu0 0.0
    %1350 = vmatpush1.msra.mxu0 %v489
    %1351 = vmatprep.subr.mxu0 0.0
    %1352 = vmatpush1.msra.mxu0 %v494
    %1353 = vmatprep.subr.mxu0 0.0
    %1354 = vmatpush1.msra.mxu0 %v499
    %1355 = vmatprep.subr.mxu0 0.0
    %1356 = vmatpush1.msra.mxu0 %v504
    %1357 = vmatprep.subr.mxu0 0.0
    %1358 = vmatpush1.msra.mxu0 %v509
    %1359 = vmatprep.subr.mxu0 0.0
    %1360 = vmatpush1.msra.mxu0 %v514
    %1361 = vmatprep.subr.mxu0 0.0
    %1362 = vmatpush1.msra.mxu0 %v519
    %1363 = vmatprep.subr.mxu0 0.0
    %1364 = vmatpush1.msra.mxu0 %v524
    %1365 = vmatprep.subr.mxu0 0.0
    %1366 = vmatpush1.msra.mxu0 %v529
    %1367 = vmatprep.subr.mxu0 0.0
    %1368 = vmatpush1.msra.mxu0 %v534
    %1369 = vmatprep.subr.mxu0 0.0
    %1370 = vmatpush1.msra.mxu0 %v539
    %1371 = vmatprep.subr.mxu0 0.0
    %1372 = vmatpush1.msra.mxu0 %v544
    %1373 = vmatprep.subr.mxu0 0.0
    %1374 = vmatpush1.msra.mxu0 %v549
    %1375 = vmatprep.subr.mxu0 0.0
    %1376 = vmatpush1.msra.mxu0 %v554
    %1377 = vmatprep.subr.mxu0 0.0
    %1378 = vmatpush1.msra.mxu0 %v559
    %1379 = vmatprep.subr.mxu0 0.0
    %1380 = vmatpush1.msra.mxu0 %v564
    %1381 = vmatprep.subr.mxu0 0.0
    %1382 = vmatpush1.msra.mxu0 %v569
    %1383 = vmatprep.mubr.f32.mxu0 %v88
    %1384 = vmatmul.mubr.f32.gmra.mrb[0].mxu0 %v87
    %v1385 = vpop.f32.mrb[0].mxu0
    %v1386 = vadd.f32 %v1316, %v1385
    %v1387 = vpop.f32.mrb[0].mxu0
    %1388 = vdwg.mxu0
    %1389 = vmatprep.subr.mxu0 0.0
    %1390 = vmatpush1.msra.mxu0 %v574
    %1391 = vmatprep.subr.mxu0 0.0
    %1392 = vmatpush1.msra.mxu0 %v579
    %1393 = vmatprep.subr.mxu0 0.0
    %1394 = vmatpush1.msra.mxu0 0.0
    %1395 = vmatprep.subr.mxu0 0.0
    %1396 = vmatpush1.msra.mxu0 0.0
    %1397 = vmatprep.subr.mxu0 0.0
    %1398 = vmatpush1.msra.mxu0 0.0
    %1399 = vmatprep.subr.mxu0 0.0
    %1400 = vmatpush1.msra.mxu0 0.0
    %1401 = vmatprep.subr.mxu0 0.0
    %1402 = vmatpush1.msra.mxu0 0.0
    %1403 = vmatprep.subr.mxu0 0.0
    %1404 = vmatpush1.msra.mxu0 0.0
    %1405 = vmatprep.subr.mxu0 0.0
    %1406 = vmatpush1.msra.mxu0 0.0
    %1407 = vmatprep.subr.mxu0 0.0
    %1408 = vmatpush1.msra.mxu0 0.0
    %1409 = vmatprep.subr.mxu0 0.0
    %1410 = vmatpush1.msra.mxu0 0.0
    %1411 = vmatprep.subr.mxu0 0.0
    %1412 = vmatpush1.msra.mxu0 0.0
    %1413 = vmatprep.subr.mxu0 0.0
    %1414 = vmatpush1.msra.mxu0 0.0
    %1415 = vmatprep.subr.mxu0 0.0
    %1416 = vmatpush1.msra.mxu0 0.0
    %1417 = vmatprep.subr.mxu0 0.0
    %1418 = vmatpush1.msra.mxu0 0.0
    %1419 = vmatprep.subr.mxu0 0.0
    %1420 = vmatpush1.msra.mxu0 0.0
    %1421 = vmatprep.subr.mxu0 0.0
    %1422 = vmatpush1.msra.mxu0 0.0
    %1423 = vmatprep.subr.mxu0 0.0
    %1424 = vmatpush1.msra.mxu0 0.0
    %1425 = vmatprep.subr.mxu0 0.0
    %1426 = vmatpush1.msra.mxu0 0.0
    %1427 = vmatprep.subr.mxu0 0.0
    %1428 = vmatpush1.msra.mxu0 0.0
    %1429 = vmatprep.subr.mxu0 0.0
    %1430 = vmatpush1.msra.mxu0 0.0
    %1431 = vmatprep.subr.mxu0 0.0
    %1432 = vmatpush1.msra.mxu0 0.0
    %1433 = vmatprep.subr.mxu0 0.0
    %1434 = vmatpush1.msra.mxu0 0.0
    %1435 = vmatprep.subr.mxu0 0.0
    %1436 = vmatpush1.msra.mxu0 0.0
    %1437 = vmatprep.subr.mxu0 0.0
    %1438 = vmatpush1.msra.mxu0 0.0
    %1439 = vmatprep.subr.mxu0 0.0
    %1440 = vmatpush1.msra.mxu0 0.0
    %1441 = vmatprep.subr.mxu0 0.0
    %1442 = vmatpush1.msra.mxu0 0.0
    %1443 = vmatprep.subr.mxu0 0.0
    %1444 = vmatpush1.msra.mxu0 0.0
    %1445 = vmatprep.subr.mxu0 0.0
    %1446 = vmatpush1.msra.mxu0 0.0
    %1447 = vmatprep.subr.mxu0 0.0
    %1448 = vmatpush1.msra.mxu0 0.0
    %1449 = vmatprep.subr.mxu0 0.0
    %1450 = vmatpush1.msra.mxu0 0.0
    %1451 = vmatprep.subr.mxu0 0.0
    %1452 = vmatpush1.msra.mxu0 0.0
    %1453 = vmatprep.mubr.f32.mxu0 0.0
    %1454 = vmatmul.mubr.f32.gmra.mrb[0].mxu0 %v609
    %v1455 = vpop.f32.mrb[0].mxu0
    %v1456 = vadd.f32 %v1386, %v1455
    %v1457 = vpop.f32.mrb[0].mxu0
    %1458 = vdwg.mxu0
    %v1459 = vmax.f32 %v891, 0.0
    %v1460 = vmax.f32 %v893, 0.0
    %v1461 = vmax.f32 %v1175, 0.0
    %v1462 = vmax.f32 %v1177, 0.0
    %v1463 = vmax.f32 %v1456, 0.0
    %v1464 = vld [vmem:[#allocation8] sm:$0xff]
    %v1465 = vld [vmem:[#allocation8 + $0x8] sm:$0xff]
    %v1466 = vld [vmem:[#allocation8 + $0x10] sm:$0xff]
    %v1467 = vld [vmem:[#allocation8 + $0x18] sm:$0xff]
    %v1468 = vld [vmem:[#allocation8 + $0x20] sm:$0xff]
    %v1469 = vld [vmem:[#allocation8 + $0x28] sm:$0xff]
    %v1470 = vld [vmem:[#allocation8 + $0x30] sm:$0xff]
    %v1471 = vld [vmem:[#allocation8 + $0x38] sm:$0xff]
    %v1472 = vld [vmem:[#allocation8 + $0x40] sm:$0xff]
    %v1473 = vld [vmem:[#allocation8 + $0x48] sm:$0xff]
    %v1474 = vld [vmem:[#allocation8 + $0x50] sm:$0xff]
    %v1475 = vld [vmem:[#allocation8 + $0x58] sm:$0xff]
    %v1476 = vld [vmem:[#allocation8 + $0x60] sm:$0xff]
    %v1477 = vld [vmem:[#allocation8 + $0x68] sm:$0xff]
    %v1478 = vld [vmem:[#allocation8 + $0x70] sm:$0xff]
    %v1479 = vld [vmem:[#allocation8 + $0x78] sm:$0xff]
    %v1480 = vld [vmem:[#allocation8 + $0x80] sm:$0xff]
    %v1481 = vld [vmem:[#allocation8 + $0x88] sm:$0xff]
    %v1482 = vld [vmem:[#allocation8 + $0x90] sm:$0xff]
    %v1483 = vld [vmem:[#allocation8 + $0x98] sm:$0xff]
    %v1484 = vld [vmem:[#allocation8 + $0xa0] sm:$0xff]
    %v1485 = vld [vmem:[#allocation8 + $0xa8] sm:$0xff]
    %v1486 = vld [vmem:[#allocation8 + $0xb0] sm:$0xff]
    %v1487 = vld [vmem:[#allocation8 + $0xb8] sm:$0xff]
    %v1488 = vld [vmem:[#allocation8 + $0xc0] sm:$0xff]
    %v1489 = vld [vmem:[#allocation8 + $0xc8] sm:$0xff]
    %v1490 = vld [vmem:[#allocation8 + $0xd0] sm:$0xff]
    %v1491 = vld [vmem:[#allocation8 + $0xd8] sm:$0xff]
    %v1492 = vld [vmem:[#allocation8 + $0xe0] sm:$0xff]
    %v1493 = vld [vmem:[#allocation8 + $0xe8] sm:$0xff]
    %v1494 = vld [vmem:[#allocation8 + $0xf0] sm:$0xff]
    %v1495 = vld [vmem:[#allocation8 + $0xf8] sm:$0xff]
    %v1496 = vld [vmem:[#allocation8 + $0x100] sm:$0xff]
    %v1497 = vld [vmem:[#allocation8 + $0x108] sm:$0xff]
    %v1498 = vld [vmem:[#allocation8 + $0x110] sm:$0xff]
    %v1499 = vld [vmem:[#allocation8 + $0x118] sm:$0xff]
    %v1500 = vld [vmem:[#allocation8 + $0x120] sm:$0xff]
    %v1501 = vld [vmem:[#allocation8 + $0x128] sm:$0xff]
    %v1502 = vld [vmem:[#allocation8 + $0x130] sm:$0xff]
    %v1503 = vld [vmem:[#allocation8 + $0x138] sm:$0xff]
    %v1504 = vld [vmem:[#allocation8 + $0x140] sm:$0xff]
    %v1505 = vld [vmem:[#allocation8 + $0x148] sm:$0xff]
    %v1506 = vld [vmem:[#allocation8 + $0x150] sm:$0xff]
    %v1507 = vld [vmem:[#allocation8 + $0x158] sm:$0xff]
    %v1508 = vld [vmem:[#allocation8 + $0x160] sm:$0xff]
    %v1509 = vld [vmem:[#allocation8 + $0x168] sm:$0xff]
    %v1510 = vld [vmem:[#allocation8 + $0x170] sm:$0xff]
    %v1511 = vld [vmem:[#allocation8 + $0x178] sm:$0xff]
    %v1512 = vld [vmem:[#allocation8 + $0x180] sm:$0xff]
    %v1513 = vld [vmem:[#allocation8 + $0x188] sm:$0xff]
    %v1514 = vld [vmem:[#allocation8 + $0x190] sm:$0xff]
    %v1515 = vld [vmem:[#allocation8 + $0x198] sm:$0xff]
    %v1516 = vld [vmem:[#allocation8 + $0x1a0] sm:$0xff]
    %v1517 = vld [vmem:[#allocation8 + $0x1a8] sm:$0xff]
    %v1518 = vld [vmem:[#allocation8 + $0x1b0] sm:$0xff]
    %v1519 = vld [vmem:[#allocation8 + $0x1b8] sm:$0xff]
    %v1520 = vld [vmem:[#allocation8 + $0x1c0] sm:$0xff]
    %v1521 = vld [vmem:[#allocation8 + $0x1c8] sm:$0xff]
    %v1522 = vld [vmem:[#allocation8 + $0x1d0] sm:$0xff]
    %v1523 = vld [vmem:[#allocation8 + $0x1d8] sm:$0xff]
    %v1524 = vld [vmem:[#allocation8 + $0x1e0] sm:$0xff]
    %v1525 = vld [vmem:[#allocation8 + $0x1e8] sm:$0xff]
    %v1526 = vld [vmem:[#allocation8 + $0x1f0] sm:$0xff]
    %v1527 = vld [vmem:[#allocation8 + $0x1f8] sm:$0xff]
    %v1528 = vld [vmem:[#allocation8 + $0x200] sm:$0xff]
    %v1529 = vld [vmem:[#allocation8 + $0x208] sm:$0xff]
    %v1530 = vld [vmem:[#allocation8 + $0x210] sm:$0xff]
    %v1531 = vld [vmem:[#allocation8 + $0x218] sm:$0xff]
    %v1532 = vld [vmem:[#allocation8 + $0x220] sm:$0xff]
    %v1533 = vld [vmem:[#allocation8 + $0x228] sm:$0xff]
    %v1534 = vld [vmem:[#allocation8 + $0x230] sm:$0xff]
    %v1535 = vld [vmem:[#allocation8 + $0x238] sm:$0xff]
    %v1536 = vld [vmem:[#allocation8 + $0x240] sm:$0xff]
    %v1537 = vld [vmem:[#allocation8 + $0x248] sm:$0xff]
    %v1538 = vld [vmem:[#allocation8 + $0x250] sm:$0xff]
    %v1539 = vld [vmem:[#allocation8 + $0x258] sm:$0xff]
    %v1540 = vld [vmem:[#allocation8 + $0x260] sm:$0xff]
    %v1541 = vld [vmem:[#allocation8 + $0x268] sm:$0xff]
    %v1542 = vld [vmem:[#allocation8 + $0x270] sm:$0xff]
    %v1543 = vld [vmem:[#allocation8 + $0x278] sm:$0xff]
    %v1544 = vld [vmem:[#allocation10] sm:$0x1]
    %v1546 = vlaneseq
    %v1547 = vshrl.u32 %v1546, 7
    %v1548 = vsub.s32 0, %v1547
    %v1549 = vrot.slane %v1544, %v1548
    %1551 = vmatprep.subr.mxu0 0.0
    %1552 = vmatpush1.msra.mxu0 %v1464
    %1553 = vmatprep.subr.mxu0 0.0
    %1554 = vmatpush1.msra.mxu0 %v1465
    %1555 = vmatprep.subr.mxu0 0.0
    %1556 = vmatpush1.msra.mxu0 %v1466
    %1557 = vmatprep.subr.mxu0 0.0
    %1558 = vmatpush1.msra.mxu0 %v1467
    %1559 = vmatprep.subr.mxu0 0.0
    %1560 = vmatpush1.msra.mxu0 %v1468
    %1561 = vmatprep.subr.mxu0 0.0
    %1562 = vmatpush1.msra.mxu0 %v1469
    %1563 = vmatprep.subr.mxu0 0.0
    %1564 = vmatpush1.msra.mxu0 %v1470
    %1565 = vmatprep.subr.mxu0 0.0
    %1566 = vmatpush1.msra.mxu0 %v1471
    %1567 = vmatprep.subr.mxu0 0.0
    %1568 = vmatpush1.msra.mxu0 %v1472
    %1569 = vmatprep.subr.mxu0 0.0
    %1570 = vmatpush1.msra.mxu0 %v1473
    %1571 = vmatprep.subr.mxu0 0.0
    %1572 = vmatpush1.msra.mxu0 %v1474
    %1573 = vmatprep.subr.mxu0 0.0
    %1574 = vmatpush1.msra.mxu0 %v1475
    %1575 = vmatprep.subr.mxu0 0.0
    %1576 = vmatpush1.msra.mxu0 %v1476
    %1577 = vmatprep.subr.mxu0 0.0
    %1578 = vmatpush1.msra.mxu0 %v1477
    %1579 = vmatprep.subr.mxu0 0.0
    %1580 = vmatpush1.msra.mxu0 %v1478
    %1581 = vmatprep.subr.mxu0 0.0
    %1582 = vmatpush1.msra.mxu0 %v1479
    %1583 = vmatprep.subr.mxu0 0.0
    %1584 = vmatpush1.msra.mxu0 %v1480
    %1585 = vmatprep.subr.mxu0 0.0
    %1586 = vmatpush1.msra.mxu0 %v1481
    %1587 = vmatprep.subr.mxu0 0.0
    %1588 = vmatpush1.msra.mxu0 %v1482
    %1589 = vmatprep.subr.mxu0 0.0
    %1590 = vmatpush1.msra.mxu0 %v1483
    %1591 = vmatprep.subr.mxu0 0.0
    %1592 = vmatpush1.msra.mxu0 %v1484
    %1593 = vmatprep.subr.mxu0 0.0
    %1594 = vmatpush1.msra.mxu0 %v1485
    %1595 = vmatprep.subr.mxu0 0.0
    %1596 = vmatpush1.msra.mxu0 %v1486
    %1597 = vmatprep.subr.mxu0 0.0
    %1598 = vmatpush1.msra.mxu0 %v1487
    %1599 = vmatprep.subr.mxu0 0.0
    %1600 = vmatpush1.msra.mxu0 %v1488
    %1601 = vmatprep.subr.mxu0 0.0
    %1602 = vmatpush1.msra.mxu0 %v1489
    %1603 = vmatprep.subr.mxu0 0.0
    %1604 = vmatpush1.msra.mxu0 %v1490
    %1605 = vmatprep.subr.mxu0 0.0
    %1606 = vmatpush1.msra.mxu0 %v1491
    %1607 = vmatprep.subr.mxu0 0.0
    %1608 = vmatpush1.msra.mxu0 %v1492
    %1609 = vmatprep.subr.mxu0 0.0
    %1610 = vmatpush1.msra.mxu0 %v1493
    %1611 = vmatprep.subr.mxu0 0.0
    %1612 = vmatpush1.msra.mxu0 %v1494
    %1613 = vmatprep.subr.mxu0 0.0
    %1614 = vmatpush1.msra.mxu0 %v1495
    %1615 = vmatprep.mubr.f32.mxu0 %v1460
    %1616 = vmatmul.mubr.f32.gmra.mrb[0].mxu0 %v1459
    %v1617 = vpop.f32.mrb[0].mxu0
    %v1618 = vadd.f32 %v1549, %v1617
    %v1619 = vpop.f32.mrb[0].mxu0
    %1620 = vdwg.mxu0
    %1621 = vmatprep.subr.mxu0 0.0
    %1622 = vmatpush1.msra.mxu0 %v1496
    %1623 = vmatprep.subr.mxu0 0.0
    %1624 = vmatpush1.msra.mxu0 %v1497
    %1625 = vmatprep.subr.mxu0 0.0
    %1626 = vmatpush1.msra.mxu0 %v1498
    %1627 = vmatprep.subr.mxu0 0.0
    %1628 = vmatpush1.msra.mxu0 %v1499
    %1629 = vmatprep.subr.mxu0 0.0
    %1630 = vmatpush1.msra.mxu0 %v1500
    %1631 = vmatprep.subr.mxu0 0.0
    %1632 = vmatpush1.msra.mxu0 %v1501
    %1633 = vmatprep.subr.mxu0 0.0
    %1634 = vmatpush1.msra.mxu0 %v1502
    %1635 = vmatprep.subr.mxu0 0.0
    %1636 = vmatpush1.msra.mxu0 %v1503
    %1637 = vmatprep.subr.mxu0 0.0
    %1638 = vmatpush1.msra.mxu0 %v1504
    %1639 = vmatprep.subr.mxu0 0.0
    %1640 = vmatpush1.msra.mxu0 %v1505
    %1641 = vmatprep.subr.mxu0 0.0
    %1642 = vmatpush1.msra.mxu0 %v1506
    %1643 = vmatprep.subr.mxu0 0.0
    %1644 = vmatpush1.msra.mxu0 %v1507
    %1645 = vmatprep.subr.mxu0 0.0
    %1646 = vmatpush1.msra.mxu0 %v1508
    %1647 = vmatprep.subr.mxu0 0.0
    %1648 = vmatpush1.msra.mxu0 %v1509
    %1649 = vmatprep.subr.mxu0 0.0
    %1650 = vmatpush1.msra.mxu0 %v1510
    %1651 = vmatprep.subr.mxu0 0.0
    %1652 = vmatpush1.msra.mxu0 %v1511
    %1653 = vmatprep.subr.mxu0 0.0
    %1654 = vmatpush1.msra.mxu0 %v1512
    %1655 = vmatprep.subr.mxu0 0.0
    %1656 = vmatpush1.msra.mxu0 %v1513
    %1657 = vmatprep.subr.mxu0 0.0
    %1658 = vmatpush1.msra.mxu0 %v1514
    %1659 = vmatprep.subr.mxu0 0.0
    %1660 = vmatpush1.msra.mxu0 %v1515
    %1661 = vmatprep.subr.mxu0 0.0
    %1662 = vmatpush1.msra.mxu0 %v1516
    %1663 = vmatprep.subr.mxu0 0.0
    %1664 = vmatpush1.msra.mxu0 %v1517
    %1665 = vmatprep.subr.mxu0 0.0
    %1666 = vmatpush1.msra.mxu0 %v1518
    %1667 = vmatprep.subr.mxu0 0.0
    %1668 = vmatpush1.msra.mxu0 %v1519
    %1669 = vmatprep.subr.mxu0 0.0
    %1670 = vmatpush1.msra.mxu0 %v1520
    %1671 = vmatprep.subr.mxu0 0.0
    %1672 = vmatpush1.msra.mxu0 %v1521
    %1673 = vmatprep.subr.mxu0 0.0
    %1674 = vmatpush1.msra.mxu0 %v1522
    %1675 = vmatprep.subr.mxu0 0.0
    %1676 = vmatpush1.msra.mxu0 %v1523
    %1677 = vmatprep.subr.mxu0 0.0
    %1678 = vmatpush1.msra.mxu0 %v1524
    %1679 = vmatprep.subr.mxu0 0.0
    %1680 = vmatpush1.msra.mxu0 %v1525
    %1681 = vmatprep.subr.mxu0 0.0
    %1682 = vmatpush1.msra.mxu0 %v1526
    %1683 = vmatprep.subr.mxu0 0.0
    %1684 = vmatpush1.msra.mxu0 %v1527
    %1685 = vmatprep.mubr.f32.mxu0 %v1462
    %1686 = vmatmul.mubr.f32.gmra.mrb[0].mxu0 %v1461
    %v1687 = vpop.f32.mrb[0].mxu0
    %v1688 = vadd.f32 %v1618, %v1687
    %v1689 = vpop.f32.mrb[0].mxu0
    %1690 = vdwg.mxu0
    %1691 = vmatprep.subr.mxu0 0.0
    %1692 = vmatpush1.msra.mxu0 %v1528
    %1693 = vmatprep.subr.mxu0 0.0
    %1694 = vmatpush1.msra.mxu0 %v1529
    %1695 = vmatprep.subr.mxu0 0.0
    %1696 = vmatpush1.msra.mxu0 %v1530
    %1697 = vmatprep.subr.mxu0 0.0
    %1698 = vmatpush1.msra.mxu0 %v1531
    %1699 = vmatprep.subr.mxu0 0.0
    %1700 = vmatpush1.msra.mxu0 %v1532
    %1701 = vmatprep.subr.mxu0 0.0
    %1702 = vmatpush1.msra.mxu0 %v1533
    %1703 = vmatprep.subr.mxu0 0.0
    %1704 = vmatpush1.msra.mxu0 %v1534
    %1705 = vmatprep.subr.mxu0 0.0
    %1706 = vmatpush1.msra.mxu0 %v1535
    %1707 = vmatprep.subr.mxu0 0.0
    %1708 = vmatpush1.msra.mxu0 %v1536
    %1709 = vmatprep.subr.mxu0 0.0
    %1710 = vmatpush1.msra.mxu0 %v1537
    %1711 = vmatprep.subr.mxu0 0.0
    %1712 = vmatpush1.msra.mxu0 %v1538
    %1713 = vmatprep.subr.mxu0 0.0
    %1714 = vmatpush1.msra.mxu0 %v1539
    %1715 = vmatprep.subr.mxu0 0.0
    %1716 = vmatpush1.msra.mxu0 %v1540
    %1717 = vmatprep.subr.mxu0 0.0
    %1718 = vmatpush1.msra.mxu0 %v1541
    %1719 = vmatprep.subr.mxu0 0.0
    %1720 = vmatpush1.msra.mxu0 %v1542
    %1721 = vmatprep.subr.mxu0 0.0
    %1722 = vmatpush1.msra.mxu0 %v1543
    %1723 = vmatprep.subr.mxu0 0.0
    %1724 = vmatpush1.msra.mxu0 0.0
    %1725 = vmatprep.subr.mxu0 0.0
    %1726 = vmatpush1.msra.mxu0 0.0
    %1727 = vmatprep.subr.mxu0 0.0
    %1728 = vmatpush1.msra.mxu0 0.0
    %1729 = vmatprep.subr.mxu0 0.0
    %1730 = vmatpush1.msra.mxu0 0.0
    %1731 = vmatprep.subr.mxu0 0.0
    %1732 = vmatpush1.msra.mxu0 0.0
    %1733 = vmatprep.subr.mxu0 0.0
    %1734 = vmatpush1.msra.mxu0 0.0
    %1735 = vmatprep.subr.mxu0 0.0
    %1736 = vmatpush1.msra.mxu0 0.0
    %1737 = vmatprep.subr.mxu0 0.0
    %1738 = vmatpush1.msra.mxu0 0.0
    %1739 = vmatprep.subr.mxu0 0.0
    %1740 = vmatpush1.msra.mxu0 0.0
    %1741 = vmatprep.subr.mxu0 0.0
    %1742 = vmatpush1.msra.mxu0 0.0
    %1743 = vmatprep.subr.mxu0 0.0
    %1744 = vmatpush1.msra.mxu0 0.0
    %1745 = vmatprep.subr.mxu0 0.0
    %1746 = vmatpush1.msra.mxu0 0.0
    %1747 = vmatprep.subr.mxu0 0.0
    %1748 = vmatpush1.msra.mxu0 0.0
    %1749 = vmatprep.subr.mxu0 0.0
    %1750 = vmatpush1.msra.mxu0 0.0
    %1751 = vmatprep.subr.mxu0 0.0
    %1752 = vmatpush1.msra.mxu0 0.0
    %1753 = vmatprep.subr.mxu0 0.0
    %1754 = vmatpush1.msra.mxu0 0.0
    %1755 = vmatprep.mubr.f32.mxu0 0.0
    %1756 = vmatmul.mubr.f32.gmra.mrb[0].mxu0 %v1463
    %v1757 = vpop.f32.mrb[0].mxu0
    %v1758 = vadd.f32 %v1688, %v1757
    %v1759 = vpop.f32.mrb[0].mxu0
    %1760 = vdwg.mxu0
    %v1761 = vlaneseq
    %v1762 = vand.u32 %v1761, 127
    %vm1763 = vcmp.lt.s32.totalorder %v1762, 10
    %v1764 = vsel %vm1763, %v1758, -1e+30
    %1765 = vmax.xlane.f32.xlu0 %v1764
    %v1766 = vpop.xlane.xlu0 %1765
    %v1767 = vsub.f32 %v1764, %v1766
    %v1768 = vmul.f32 %v1767, 1.442695
    %v1769 = vpow.pop %v1768
    %1770 = vadd.xlane.f32.xlu0 %v1769
    %v1771 = vpop.xlane.xlu0 %1770
    %v1772 = vlog2.pop %v1771
    %v1773 = vmul.f32 %v1772, 0.6931472
    %v1774 = vsub.f32 %v1767, %v1773
    %1775 = vst [vmem:[#allocation11] sm:$0xff] %v1774
    // Predicated region
    $region42: #{tpu_custom_call.1} parent=1 // pred_check
      _
    $region43: #{tpu_custom_call.1} parent=1 // pred_check_branch
      %1777 = sbr.rel (0) target = $region45
    $region44: #{tpu_custom_call.1} parent=1 // pred_region
      %s1779 = ssub.s32 128, 128
      %1780 = vsyncadd [#allocation4], %s1779
      %s1782 = sshll.u32 [#allocation11], 4
      %s1783 = int_to_ptr.vmem [resolvable:$true] %s1782
      %1785 = dma.vmem_to_hbm [thread:$0]  %s1783, 128, %s5, [#allocation4]
    $region45: #{tpu_custom_call.1} parent=1 // pred_fallthru
      _
    // Predicated region
    $region46: #{tpu_custom_call.1} parent=1 // pred_check
      _
    $region47: #{tpu_custom_call.1} parent=1 // pred_check_branch
      %1787 = sbr.rel (0) target = $region49
    $region48: #{tpu_custom_call.1} parent=1 // pred_region
      %1788 = dma.done [#allocation4], 128
    $region49: #{tpu_custom_call.1} parent=1 // pred_fallthru
      _
    %1789 = vsyncpa [#allocation3], 1
    %1790 = vsyncpa [#allocation6], 1
    %1791 = vsyncpa [#allocation9], 1
    %1792 = vsyncpa [#allocation4], 1

</llo_original>
